<compile_context>
chip_gen: v6e
topology: v6e:2x2x1
jax: 0.10.0
libtpu: 0.0.40
codegen_flags: <defaults>
</compile_context>

<pallas_src>
import functools

import jax
import jax.numpy as jnp
from jax import lax
from jax.experimental import pallas as pl
from jax.experimental.pallas import tpu as pltpu


def _cdiv(a, b):
    return -(-a // b)


def _round_up(v, m):
    return _cdiv(v, m) * m


# ----------------------------------------------------------------------------
# Kernel body.  Grid = (B, phase, T); x block (1, C, thw); out block (1, thw, C)
# ----------------------------------------------------------------------------
def _cra_kernel(x_ref, wq_ref, bq_ref, wk_ref, bk_ref, wv_ref, bv_ref,
                out_ref, qr_ref, colsum_ref, vrow_ref, attn_ref,
                *, hw, ragged):
    p = pl.program_id(1)
    t = pl.program_id(2)
    thw = x_ref.shape[2]                      # HW tile width (static)
    start = t * thw
    if thw % 128 == 0:
        start = pl.multiple_of(start, 128)

    # ------------------------- phase 0: stream x tiles -----------------------
    @pl.when((p == 0) & (t == 0))
    def _init():
        colsum_ref[...] = jnp.zeros_like(colsum_ref)

    @pl.when(p == 0)
    def _stream():
        xt = x_ref[0]                                             # (C, thw)
        if ragged:
            col = lax.broadcasted_iota(jnp.int32, xt.shape, 1) + start
            xt = jnp.where(col < hw, xt, jnp.zeros((), xt.dtype))
        # lane-dense channel projection on the MXU (f32 accumulation, native
        # streaming dtype in — no explicit f32 cast of the tile).
        qr_ref[:, pl.ds(start, thw)] = jnp.dot(
            wq_ref[...], xt, preferred_element_type=jnp.float32)  # (Cr, thw)
        # channel-wise spatial sum on the VPU/XLU (keeps the MXU for Wq@x).
        colsum_ref[...] += jnp.sum(xt, axis=1, keepdims=True,
                                   dtype=jnp.float32)             # (C, 1)

    # -------------- phase 1, first tile: k / v, fused scores, softmax --------
    @pl.when((p == 1) & (t == 0))
    def _reduce():
        avg = colsum_ref[...] * (1.0 / float(hw))                 # (C, 1)
        k = jnp.dot(wk_ref[...], avg,
                    preferred_element_type=jnp.float32) + bk_ref[...]   # (Cr,1)
        v = jnp.dot(wv_ref[...], avg,
                    preferred_element_type=jnp.float32) + bv_ref[...]   # (C, 1)
        vrow_ref[...] = jnp.transpose(v)                          # (1, C)

        # scores[n] = q_n . k = (Wq x)_n . k + bq . k   (Q never materialised);
        # the (1,Cr)@(Cr,HW) contraction runs on the otherwise-idle MXU.
        bqk = jnp.sum(bq_ref[...] * k, axis=0, keepdims=True)     # (1, 1)
        k_row = jnp.transpose(k)                                  # (1, Cr)
        scores = jnp.dot(k_row, qr_ref[...],
                         preferred_element_type=jnp.float32) + bqk  # (1, HWp)
        if ragged:
            col = lax.broadcasted_iota(jnp.int32, scores.shape, 1)
            scores = jnp.where(col < hw, scores, -jnp.inf)

        # softmax over HW on a lane-dense (1, HW_pad) row
        m = jnp.max(scores, axis=1, keepdims=True)
        e = jnp.exp(scores - m)
        s = jnp.sum(e, axis=1, keepdims=True)
        attn_ref[...] = e * pl.reciprocal(s, approx=True)

    # ----------------------- phase 1: write output tiles ---------------------
    @pl.when(p == 1)
    def _write():
        attn_slice = attn_ref[:, pl.ds(start, thw)]               # (1, thw)
        # rank-1 outer product on the MXU: (thw, C) = attn_sliceᵀ @ v_row.
        tile = lax.dot_general(attn_slice, vrow_ref[...],
                               (((0,), (0,)), ((), ())),
                               preferred_element_type=jnp.float32)
        out_ref[0] = tile.astype(out_ref.dtype)


# ----------------------------------------------------------------------------
# VMEM / tiling planner
# ----------------------------------------------------------------------------
def _vmem_capacity_bytes():
    try:
        return int(pltpu.get_tpu_info().vmem_capacity_bytes)
    except Exception:
        return 64 * 2 ** 20          # conservative (v7x per-TensorCore)


def _plan_hw_tiling(HW, C, Cr, x_itemsize, budget, max_hw_tile=None):
    """Pick the HW tile width. Returns (thw, T, hw_pad, vmem_needed_bytes)."""
    r8 = lambda v: _round_up(v, 8)
    r128 = lambda v: _round_up(v, 128)

    # Tile-independent VMEM (weights are double-buffered by the pipeline).
    fixed = 2 * (r8(Cr) * r128(C) * x_itemsize        # wq (streaming dtype)
                 + r8(Cr) * r128(C) * 4               # wk
                 + r8(C) * r128(C) * 4                # wv
                 + 2 * r8(Cr) * 128 * 4               # bq, bk
                 + r8(C) * 128 * 4)                   # bv
    fixed += r8(C) * 128 * 4 + 8 * r128(C) * 4        # colsum + vrow scratch

    def need(thw, T):
        hw_pad = T * thw
        tiles = 2 * (r8(C) * r128(thw) + r8(thw) * r128(C)) * x_itemsize
        scratch = (r8(Cr) + 8) * r128(hw_pad) * 4     # qr + attn
        return fixed + tiles + scratch

    # Target ~4 MiB x blocks (big enough to amortise per-step overhead on
    # 128-MiB parts); the budget loop below shrinks further on v7x.
    cap = min(8192, (4 * 2 ** 20) // max(1, C * x_itemsize))
    if max_hw_tile is not None:
        cap = min(cap, max_hw_tile)
    cap = max(cap, 1)

    # Option A: one full-extent tile (any HW, including HW < 128).
    if HW <= cap and need(HW, 1) <= budget:
        return HW, 1, HW, need(HW, 1)
    if HW < 128:
        return HW, 1, HW, need(HW, 1)

    # Option B: stream 128-multiple tiles; ragged tail is masked in-kernel.
    thw = max(128, min((HW // 128) * 128, (cap // 128) * 128))
    while thw > 128 and need(thw, _cdiv(HW, thw)) > budget:
        thw -= 128
    T = _cdiv(HW, thw)
    return thw, T, T * thw, need(thw, T)


# ----------------------------------------------------------------------------
# Wrapper
# ----------------------------------------------------------------------------
def cra_forward(x, wq, bq, wk, bk, wv, bv, *, max_hw_tile=None):
    """x: (B, C, H, W) f32/bf16; weights in nn.Linear convention:
       wq (Cr, C), bq (Cr,), wk (Cr, C), bk (Cr,), wv (C, C), bv (C,)."""
    B, C, H, W = x.shape
    HW = H * W
    Cr = wq.shape[0]

    x3 = x.reshape(B, C, HW)            # metadata-only: native (B, C, HW)
    isz = jnp.dtype(x.dtype).itemsize

    capacity = _vmem_capacity_bytes()
    budget = max(min(int(capacity * 0.75), capacity - 16 * 2 ** 20),
                 24 * 2 ** 20)
    thw, T, hw_pad, vmem_needed = _plan_hw_tiling(HW, C, Cr, isz, budget,
                                                  max_hw_tile)
    ragged = (hw_pad != HW)

    f32 = jnp.float32
    wq_ = wq.astype(x.dtype)            # MXU consumes the streaming dtype
    wk_ = wk.astype(f32)
    wv_ = wv.astype(f32)
    bq_ = bq.reshape(Cr, 1).astype(f32)
    bk_ = bk.reshape(Cr, 1).astype(f32)
    bv_ = bv.reshape(C, 1).astype(f32)

    vmem_limit = int(min(max(vmem_needed + 4 * 2 ** 20, 24 * 2 ** 20),
                         capacity - 8 * 2 ** 20))

    kernel = functools.partial(_cra_kernel, hw=HW, ragged=ragged)

    grid_spec = pltpu.PrefetchScalarGridSpec(
        num_scalar_prefetch=0,
        grid=(B, 2, T),
        in_specs=[
            # phase 0 streams tile t; phase 1 pins the last tile (no refetch)
            pl.BlockSpec((1, C, thw),
                         lambda b, p, t: (b, 0, t * (1 - p) + (T - 1) * p)),
            pl.BlockSpec((Cr, C), lambda b, p, t: (0, 0)),   # wq
            pl.BlockSpec((Cr, 1), lambda b, p, t: (0, 0)),   # bq
            pl.BlockSpec((Cr, C), lambda b, p, t: (0, 0)),   # wk
            pl.BlockSpec((Cr, 1), lambda b, p, t: (0, 0)),   # bk
            pl.BlockSpec((C, C), lambda b, p, t: (0, 0)),    # wv
            pl.BlockSpec((C, 1), lambda b, p, t: (0, 0)),    # bv
        ],
        # phase 0 parks on tile 0 (never written); phase 1 writes tile t
        out_specs=pl.BlockSpec((1, thw, C), lambda b, p, t: (b, t * p, 0)),
        scratch_shapes=[
            pltpu.VMEM((Cr, hw_pad), f32),   # Qr = Wq @ x   (lane-dense)
            pltpu.VMEM((C, 1), f32),         # spatial column sum
            pltpu.VMEM((1, C), f32),         # v as a row
            pltpu.VMEM((1, hw_pad), f32),    # softmax(attn), lane-dense
        ],
    )

    out_flat = pl.pallas_call(
        kernel,
        out_shape=jax.ShapeDtypeStruct((B, HW, C), x.dtype),
        grid_spec=grid_spec,
        compiler_params=pltpu.CompilerParams(
            dimension_semantics=("parallel", "arbitrary", "arbitrary"),
            vmem_limit_bytes=vmem_limit),
    )(x3, wq_, bq_, wk_, bk_, wv_, bv_)

    # PyTorch does out.view(B, C, H, W) on the (B, HW, C) tensor: raw reshape.
    return out_flat.reshape(B, C, H, W)


# ----------------------------------------------------------------------------
# Pure-JAX reference mirroring the PyTorch forward exactly.
# ----------------------------------------------------------------------------
def cra_reference(x, wq, bq, wk, bk, wv, bv):
    B, C, H, W = x.shape
    hp = lax.Precision.HIGHEST
    flat = x.reshape(B, C, H * W).astype(jnp.float32)
    avg = jnp.mean(flat, axis=-1, keepdims=True)                 # (B, C, 1)
    ft = jnp.transpose(flat, (0, 2, 1))
    at = jnp.transpose(avg, (0, 2, 1))
    q = jnp.einsum('bnc,rc->bnr', ft, wq, precision=hp) + bq
    k = jnp.einsum('bnc,rc->bnr', at, wk, precision=hp) + bk
    v = jnp.einsum('bnc,rc->bnr', at, wv, precision=hp) + bv
    scores = jnp.einsum('bnr,bmr->bnm', q, k, precision=hp)      # (B, HW, 1)
    attn = jax.nn.softmax(scores, axis=1)
    out = jnp.einsum('bnm,bmc->bnc', attn, v, precision=hp)      # (B, HW, C)
    return out.reshape(B, C, H, W)


def _make_inputs(key, B, C, H, W, rr):
    Cr = max(1, C // rr)
    ks = jax.random.split(key, 7)
    x = jax.random.normal(ks[0], (B, C, H, W), jnp.float32)
    bound = 1.0 / (C ** 0.5)
    wq = jax.random.uniform(ks[1], (Cr, C), jnp.float32, -bound, bound)
    bq = jax.random.uniform(ks[2], (Cr,), jnp.float32, -bound, bound)
    wk = jax.random.uniform(ks[3], (Cr, C), jnp.float32, -bound, bound)
    bk = jax.random.uniform(ks[4], (Cr,), jnp.float32, -bound, bound)
    wv = jax.random.uniform(ks[5], (C, C), jnp.float32, -bound, bound)
    bv = jax.random.uniform(ks[6], (C,), jnp.float32, -bound, bound)
    return x, (wq, bq, wk, bk, wv, bv)


if __name__ == "__main__":
    key = jax.random.PRNGKey(0)
    k1, k2, k3 = jax.random.split(key, 3)

    # Config 1: lane-dense C=128, HW=256 streamed as two 128-wide tiles.
    x1, w1 = _make_inputs(k1, 2, 128, 16, 16, 16)
    out1 = jax.block_until_ready(cra_forward(x1, *w1, max_hw_tile=128))
    ref1 = cra_reference(x1, *w1)
    assert out1.shape == (2, 128, 16, 16)
    assert jnp.allclose(out1, ref1, atol=2e-5, rtol=2e-2), "config1 mismatch"

    # Config 2: ragged streaming (HW=144 -> 128-wide tiles + masked 16 tail).
    x2, w2 = _make_inputs(k2, 1, 64, 12, 12, 16)
    out2 = jax.block_until_ready(cra_forward(x2, *w2, max_hw_tile=128))
    ref2 = cra_reference(x2, *w2)
    assert out2.shape == (1, 64, 12, 12)
    assert jnp.allclose(out2, ref2, atol=2e-5, rtol=2e-2), "config2 mismatch"

    # Config 3: tiny single full-extent tile (HW=64 < 128, Cr=2).
    x3, w3 = _make_inputs(k3, 1, 32, 8, 8, 16)
    out3 = jax.block_until_ready(cra_forward(x3, *w3))
    ref3 = cra_reference(x3, *w3)
    assert out3.shape == (1, 32, 8, 8)
    assert jnp.allclose(out3, ref3, atol=2e-5, rtol=2e-2), "config3 mismatch"

    # bf16 streaming path: x / out / wq in bf16, f32 accumulation in-kernel.
    out_bf = jax.block_until_ready(
        cra_forward(x1.astype(jnp.bfloat16), *w1, max_hw_tile=128))
    assert out_bf.dtype == jnp.bfloat16
    assert jnp.allclose(out_bf.astype(jnp.float32), ref1,
                        atol=1e-3, rtol=1e-1), "bf16 config mismatch"

    print("KERNEL_OK")
</pallas_src>

<mosaic_0001>
module attributes {stable_mosaic.version = 11 : i64} {
  func.func @_cra_kernel(%arg0: i32, %arg1: i32, %arg2: i32, %arg3: memref<1x128x128xf32, #tpu.memory_space<vmem>>, %arg4: memref<8x128xf32, #tpu.memory_space<vmem>>, %arg5: memref<8x1xf32, #tpu.memory_space<vmem>>, %arg6: memref<8x128xf32, #tpu.memory_space<vmem>>, %arg7: memref<8x1xf32, #tpu.memory_space<vmem>>, %arg8: memref<128x128xf32, #tpu.memory_space<vmem>>, %arg9: memref<128x1xf32, #tpu.memory_space<vmem>>, %arg10: memref<1x128x128xf32, #tpu.memory_space<vmem>>, %arg11: memref<8x256xf32, #tpu.memory_space<vmem>>, %arg12: memref<128x1xf32, #tpu.memory_space<vmem>>, %arg13: memref<1x128xf32, #tpu.memory_space<vmem>>, %arg14: memref<1x256xf32, #tpu.memory_space<vmem>>) attributes {dimension_semantics = [#tpu.dimension_semantics<parallel>, #tpu.dimension_semantics<arbitrary>, #tpu.dimension_semantics<arbitrary>], iteration_bounds = array<i64: 2, 2, 2>, scalar_prefetch = 0 : i64, scratch_operands = 4 : i64, tpu.core_type = #tpu.core_type<tc>, window_params = [{transform_indices = @transform_0, window_bounds = array<i64: 1, 128, 128>}, {pipeline_mode = #tpu.pipeline_mode<synchronous>, transform_indices = @transform_1, window_bounds = array<i64: 8, 128>}, {pipeline_mode = #tpu.pipeline_mode<synchronous>, transform_indices = @transform_2, window_bounds = array<i64: 8, 1>}, {pipeline_mode = #tpu.pipeline_mode<synchronous>, transform_indices = @transform_3, window_bounds = array<i64: 8, 128>}, {pipeline_mode = #tpu.pipeline_mode<synchronous>, transform_indices = @transform_4, window_bounds = array<i64: 8, 1>}, {pipeline_mode = #tpu.pipeline_mode<synchronous>, transform_indices = @transform_5, window_bounds = array<i64: 128, 128>}, {pipeline_mode = #tpu.pipeline_mode<synchronous>, transform_indices = @transform_6, window_bounds = array<i64: 128, 1>}, {transform_indices = @transform_7, window_bounds = array<i64: 1, 128, 128>}]} {
    %c128_i32 = arith.constant 128 : i32
    %0 = arith.muli %arg2, %c128_i32 : i32
    %1 = tpu.assume_multiple %0, 128 : i32
    %c0_i32 = arith.constant 0 : i32
    %2 = arith.cmpi eq, %arg1, %c0_i32 : i32
    %c0_i32_0 = arith.constant 0 : i32
    %3 = arith.cmpi eq, %arg2, %c0_i32_0 : i32
    %4 = arith.andi %2, %3 : i1
    %5 = arith.extui %4 : i1 to i32
    %c0_i32_1 = arith.constant 0 : i32
    %6 = arith.cmpi ne, %5, %c0_i32_1 : i32
    scf.if %6 {
      %cst = arith.constant 0.000000e+00 : f32
      %18 = vector.broadcast %cst : f32 to vector<128x1xf32>
      %c0 = arith.constant 0 : index
      %c0_8 = arith.constant 0 : index
      %19 = vector.load %arg12[%c0, %c0_8] : memref<128x1xf32, #tpu.memory_space<vmem>>, vector<128x1xf32>
      tpu.vector_store %arg12[%c0, %c0_8], %18 {strides = array<i32>} : memref<128x1xf32, #tpu.memory_space<vmem>>, vector<128x1xf32>,
    } else {
    }
    %c0_i32_2 = arith.constant 0 : i32
    %7 = arith.cmpi eq, %arg1, %c0_i32_2 : i32
    %8 = arith.extui %7 : i1 to i32
    %c0_i32_3 = arith.constant 0 : i32
    %9 = arith.cmpi ne, %8, %c0_i32_3 : i32
    scf.if %9 {
      %c0 = arith.constant 0 : index
      %c0_8 = arith.constant 0 : index
      %c0_9 = arith.constant 0 : index
      %18 = vector.load %arg3[%c0, %c0_8, %c0_9] : memref<1x128x128xf32, #tpu.memory_space<vmem>>, vector<1x128x128xf32>
      %19 = vector.shape_cast %18 : vector<1x128x128xf32> to vector<128x128xf32>
      %c0_10 = arith.constant 0 : index
      %c0_11 = arith.constant 0 : index
      %20 = vector.load %arg4[%c0_10, %c0_11] : memref<8x128xf32, #tpu.memory_space<vmem>>, vector<8x128xf32>
      %cst = arith.constant dense<0.000000e+00> : vector<8x128xf32>
      %21 = tpu.matmul %20, %19, %cst {dimension_numbers = #tpu.dot_dimension_numbers<[1], [0], [0], [1], [0, 0, 1, 1], [], []>} : vector<8x128xf32>, vector<128x128xf32>, vector<8x128xf32> -> vector<8x128xf32>
      %c0_12 = arith.constant 0 : index
      %22 = arith.index_cast %1 : i32 to index
      %23 = vector.load %arg11[%c0_12, %22] : memref<8x256xf32, #tpu.memory_space<vmem>>, vector<8x128xf32>
      tpu.vector_store %arg11[%c0_12, %22], %21 {strides = array<i32>} : memref<8x256xf32, #tpu.memory_space<vmem>>, vector<8x128xf32>,
      %c0_13 = arith.constant 0 : index
      %c0_14 = arith.constant 0 : index
      %24 = vector.load %arg12[%c0_13, %c0_14] : memref<128x1xf32, #tpu.memory_space<vmem>>, vector<128x1xf32>
      %cst_15 = arith.constant dense<0.000000e+00> : vector<128xf32>
      %25 = vector.multi_reduction <add>, %19, %cst_15 [1] : vector<128x128xf32> to vector<128xf32>
      %26 = vector.shape_cast %25 : vector<128xf32> to vector<128x1xf32>
      %27 = arith.addf %24, %26 : vector<128x1xf32>
      %c0_16 = arith.constant 0 : index
      %c0_17 = arith.constant 0 : index
      %28 = vector.load %arg12[%c0_16, %c0_17] : memref<128x1xf32, #tpu.memory_space<vmem>>, vector<128x1xf32>
      tpu.vector_store %arg12[%c0_16, %c0_17], %27 {strides = array<i32>} : memref<128x1xf32, #tpu.memory_space<vmem>>, vector<128x1xf32>,
    } else {
    }
    %c1_i32 = arith.constant 1 : i32
    %10 = arith.cmpi eq, %arg1, %c1_i32 : i32
    %c0_i32_4 = arith.constant 0 : i32
    %11 = arith.cmpi eq, %arg2, %c0_i32_4 : i32
    %12 = arith.andi %10, %11 : i1
    %13 = arith.extui %12 : i1 to i32
    %c0_i32_5 = arith.constant 0 : i32
    %14 = arith.cmpi ne, %13, %c0_i32_5 : i32
    scf.if %14 {
      %c0 = arith.constant 0 : index
      %c0_8 = arith.constant 0 : index
      %18 = vector.load %arg12[%c0, %c0_8] : memref<128x1xf32, #tpu.memory_space<vmem>>, vector<128x1xf32>
      %cst = arith.constant 3.906250e-03 : f32
      %19 = vector.broadcast %cst : f32 to vector<128x1xf32>
      %20 = arith.mulf %18, %19 : vector<128x1xf32>
      %c0_9 = arith.constant 0 : index
      %c0_10 = arith.constant 0 : index
      %21 = vector.load %arg6[%c0_9, %c0_10] : memref<8x128xf32, #tpu.memory_space<vmem>>, vector<8x128xf32>
      %cst_11 = arith.constant dense<0.000000e+00> : vector<8x1xf32>
      %22 = tpu.matmul %21, %20, %cst_11 {dimension_numbers = #tpu.dot_dimension_numbers<[1], [0], [0], [1], [0, 0, 1, 1], [], []>} : vector<8x128xf32>, vector<128x1xf32>, vector<8x1xf32> -> vector<8x1xf32>
      %c0_12 = arith.constant 0 : index
      %c0_13 = arith.constant 0 : index
      %23 = vector.load %arg7[%c0_12, %c0_13] : memref<8x1xf32, #tpu.memory_space<vmem>>, vector<8x1xf32>
      %24 = arith.addf %22, %23 : vector<8x1xf32>
      %c0_14 = arith.constant 0 : index
      %c0_15 = arith.constant 0 : index
      %25 = vector.load %arg8[%c0_14, %c0_15] : memref<128x128xf32, #tpu.memory_space<vmem>>, vector<128x128xf32>
      %cst_16 = arith.constant dense<0.000000e+00> : vector<128x1xf32>
      %26 = tpu.matmul %25, %20, %cst_16 {dimension_numbers = #tpu.dot_dimension_numbers<[1], [0], [0], [1], [0, 0, 1, 1], [], []>} : vector<128x128xf32>, vector<128x1xf32>, vector<128x1xf32> -> vector<128x1xf32>
      %c0_17 = arith.constant 0 : index
      %c0_18 = arith.constant 0 : index
      %27 = vector.load %arg9[%c0_17, %c0_18] : memref<128x1xf32, #tpu.memory_space<vmem>>, vector<128x1xf32>
      %28 = arith.addf %26, %27 : vector<128x1xf32>
      %29 = tpu.transpose %28, [1, 0] : vector<128x1xf32> -> vector<1x128xf32>
      %c0_19 = arith.constant 0 : index
      %c0_20 = arith.constant 0 : index
      %30 = vector.load %arg13[%c0_19, %c0_20] : memref<1x128xf32, #tpu.memory_space<vmem>>, vector<1x128xf32>
      tpu.vector_store %arg13[%c0_19, %c0_20], %29 {strides = array<i32>} : memref<1x128xf32, #tpu.memory_space<vmem>>, vector<1x128xf32>,
      %c0_21 = arith.constant 0 : index
      %c0_22 = arith.constant 0 : index
      %31 = vector.load %arg5[%c0_21, %c0_22] : memref<8x1xf32, #tpu.memory_space<vmem>>, vector<8x1xf32>
      %32 = arith.mulf %31, %24 : vector<8x1xf32>
      %cst_23 = arith.constant dense<0.000000e+00> : vector<1xf32>
      %33 = vector.multi_reduction <add>, %32, %cst_23 [0] : vector<8x1xf32> to vector<1xf32>
      %34 = vector.shape_cast %33 : vector<1xf32> to vector<1x1xf32>
      %35 = tpu.transpose %24, [1, 0] : vector<8x1xf32> -> vector<1x8xf32>
      %c0_24 = arith.constant 0 : index
      %c0_25 = arith.constant 0 : index
      %36 = vector.load %arg11[%c0_24, %c0_25] : memref<8x256xf32, #tpu.memory_space<vmem>>, vector<8x256xf32>
      %cst_26 = arith.constant dense<0.000000e+00> : vector<1x256xf32>
      %37 = tpu.matmul %35, %36, %cst_26 {dimension_numbers = #tpu.dot_dimension_numbers<[1], [0], [0], [1], [0, 0, 1, 1], [], []>} : vector<1x8xf32>, vector<8x256xf32>, vector<1x256xf32> -> vector<1x256xf32>
      %38 = vector.broadcast %34 : vector<1x1xf32> to vector<1x256xf32>
      %39 = arith.addf %37, %38 : vector<1x256xf32>
      %cst_27 = arith.constant dense<0xFF800000> : vector<1xf32>
      %40 = vector.multi_reduction <maximumf>, %39, %cst_27 [1] : vector<1x256xf32> to vector<1xf32>
      %41 = vector.shape_cast %40 : vector<1xf32> to vector<1x1xf32>
      %42 = vector.broadcast %41 : vector<1x1xf32> to vector<1x256xf32>
      %43 = arith.subf %39, %42 : vector<1x256xf32>
      %44 = math.exp %43 : vector<1x256xf32>
      %cst_28 = arith.constant dense<0.000000e+00> : vector<1xf32>
      %45 = vector.multi_reduction <add>, %44, %cst_28 [1] : vector<1x256xf32> to vector<1xf32>
      %46 = vector.shape_cast %45 : vector<1xf32> to vector<1x1xf32>
      %47 = tpu.reciprocal %46 {approx = true} : vector<1x1xf32> -> vector<1x1xf32>
      %48 = vector.broadcast %47 : vector<1x1xf32> to vector<1x256xf32>
      %49 = arith.mulf %44, %48 : vector<1x256xf32>
      %c0_29 = arith.constant 0 : index
      %c0_30 = arith.constant 0 : index
      %50 = vector.load %arg14[%c0_29, %c0_30] : memref<1x256xf32, #tpu.memory_space<vmem>>, vector<1x256xf32>
      tpu.vector_store %arg14[%c0_29, %c0_30], %49 {strides = array<i32>} : memref<1x256xf32, #tpu.memory_space<vmem>>, vector<1x256xf32>,
    } else {
    }
    %c1_i32_6 = arith.constant 1 : i32
    %15 = arith.cmpi eq, %arg1, %c1_i32_6 : i32
    %16 = arith.extui %15 : i1 to i32
    %c0_i32_7 = arith.constant 0 : i32
    %17 = arith.cmpi ne, %16, %c0_i32_7 : i32
    scf.if %17 {
      %c0 = arith.constant 0 : index
      %18 = arith.index_cast %1 : i32 to index
      %19 = vector.load %arg14[%c0, %18] : memref<1x256xf32, #tpu.memory_space<vmem>>, vector<1x128xf32>
      %c0_8 = arith.constant 0 : index
      %c0_9 = arith.constant 0 : index
      %20 = vector.load %arg13[%c0_8, %c0_9] : memref<1x128xf32, #tpu.memory_space<vmem>>, vector<1x128xf32>
      %cst = arith.constant dense<0.000000e+00> : vector<128x128xf32>
      %21 = tpu.matmul %19, %20, %cst {dimension_numbers = #tpu.dot_dimension_numbers<[0], [0], [1], [1], [0, 1, 1, 1], [], []>} : vector<1x128xf32>, vector<1x128xf32>, vector<128x128xf32> -> vector<128x128xf32>
      %c0_10 = arith.constant 0 : index
      %c0_11 = arith.constant 0 : index
      %c0_12 = arith.constant 0 : index
      %22 = vector.load %arg10[%c0_10, %c0_11, %c0_12] : memref<1x128x128xf32, #tpu.memory_space<vmem>>, vector<1x128x128xf32>
      %23 = vector.shape_cast %22 : vector<1x128x128xf32> to vector<128x128xf32>
      %24 = vector.shape_cast %21 : vector<128x128xf32> to vector<1x128x128xf32>
      tpu.vector_store %arg10[%c0_10, %c0_11, %c0_12], %24 {strides = array<i32>} : memref<1x128x128xf32, #tpu.memory_space<vmem>>, vector<1x128x128xf32>,
    } else {
    }
    return
  }
  func.func @transform_0(%arg0: i32, %arg1: i32, %arg2: i32) -> (i32, i32, i32) {
    %c1_i32 = arith.constant 1 : i32
    %0 = arith.subi %c1_i32, %arg1 : i32
    %1 = arith.muli %arg2, %0 : i32
    %c1_i32_0 = arith.constant 1 : i32
    %2 = arith.muli %c1_i32_0, %arg1 : i32
    %3 = arith.addi %1, %2 : i32
    %c0_i32 = arith.constant 0 : i32
    %c0_i32_1 = arith.constant 0 : i32
    return %arg0, %c0_i32, %3 : i32, i32, i32
  }
  func.func @transform_1(%arg0: i32, %arg1: i32, %arg2: i32) -> (i32, i32) {
    %c0_i32 = arith.constant 0 : i32
    %c0_i32_0 = arith.constant 0 : i32
    %c0_i32_1 = arith.constant 0 : i32
    return %c0_i32, %c0_i32_0 : i32, i32
  }
  func.func @transform_2(%arg0: i32, %arg1: i32, %arg2: i32) -> (i32, i32) {
    %c0_i32 = arith.constant 0 : i32
    %c0_i32_0 = arith.constant 0 : i32
    %c0_i32_1 = arith.constant 0 : i32
    return %c0_i32, %c0_i32_0 : i32, i32
  }
  func.func @transform_3(%arg0: i32, %arg1: i32, %arg2: i32) -> (i32, i32) {
    %c0_i32 = arith.constant 0 : i32
    %c0_i32_0 = arith.constant 0 : i32
    %c0_i32_1 = arith.constant 0 : i32
    return %c0_i32, %c0_i32_0 : i32, i32
  }
  func.func @transform_4(%arg0: i32, %arg1: i32, %arg2: i32) -> (i32, i32) {
    %c0_i32 = arith.constant 0 : i32
    %c0_i32_0 = arith.constant 0 : i32
    %c0_i32_1 = arith.constant 0 : i32
    return %c0_i32, %c0_i32_0 : i32, i32
  }
  func.func @transform_5(%arg0: i32, %arg1: i32, %arg2: i32) -> (i32, i32) {
    %c0_i32 = arith.constant 0 : i32
    %c0_i32_0 = arith.constant 0 : i32
    %c0_i32_1 = arith.constant 0 : i32
    return %c0_i32, %c0_i32_0 : i32, i32
  }
  func.func @transform_6(%arg0: i32, %arg1: i32, %arg2: i32) -> (i32, i32) {
    %c0_i32 = arith.constant 0 : i32
    %c0_i32_0 = arith.constant 0 : i32
    %c0_i32_1 = arith.constant 0 : i32
    return %c0_i32, %c0_i32_0 : i32, i32
  }
  func.func @transform_7(%arg0: i32, %arg1: i32, %arg2: i32) -> (i32, i32, i32) {
    %0 = arith.muli %arg2, %arg1 : i32
    %c0_i32 = arith.constant 0 : i32
    %c0_i32_0 = arith.constant 0 : i32
    return %arg0, %0, %c0_i32 : i32, i32, i32
  }
}

</mosaic_0001>

<llo_original>
// kernel: tpu_custom_call.1
$region0: #{tpu_custom_call.1}
  #allocation0 [shape = 'u32[]', space=smem, size = 0x4, offset = 0x4, fixed_abs, tag = 'smem constant byte address 0x4 - core index']
  #allocation1 [shape = 'u32[144,128]{1,0:T(1,128)}', space=vmem, size = 0x12000, scoped, tag = 'internal scratch']
  #allocation2 [shape = 'f32[8,256]{1,0:T(8,128)}', space=vmem, size = 0x2000, scoped, tag = 'scratch operand']
  #allocation3 [shape = 'f32[128,1]{1,0:T(8,128)}', space=vmem, size = 0x10000, scoped, tag = 'scratch operand']
  #allocation4 [shape = 'f32[1,128]{1,0:T(1,128)}', space=vmem, size = 0x200, scoped, tag = 'scratch operand']
  #allocation5 [shape = 'f32[1,256]{1,0:T(1,128)}', space=vmem, size = 0x400, scoped, tag = 'scratch operand']
  %s0 = inlined_call_operand.hbm [shape: f32[2,128,256], index: 0, kind: input, shape index: {}]
  %s1 = inlined_call_operand.vmem [shape: f32[8,128], index: 1, kind: input, shape index: {}]
  %s2 = inlined_call_operand.vmem [shape: f32[8,1], index: 2, kind: input, shape index: {}]
  %s3 = inlined_call_operand.vmem [shape: f32[8,128], index: 3, kind: input, shape index: {}]
  %s4 = inlined_call_operand.vmem [shape: f32[8,1], index: 4, kind: input, shape index: {}]
  %s5 = inlined_call_operand.vmem [shape: f32[128,128], index: 5, kind: input, shape index: {}]
  %s6 = inlined_call_operand.vmem [shape: f32[128,1], index: 6, kind: input, shape index: {}]
  %s7 = inlined_call_operand.hbm [shape: f32[2,256,128], index: 7, kind: output, shape index: {}]
  %s8 = sld [smem:[#allocation0]]
  $region81: #{tpu_custom_call.1} parent=0
    _
  %s10 = ssub.s32 1, %s8
  %s11 = scalar_select 0, %s10, %s8
  $region1: #{tpu_custom_call.1} parent=0
    #allocation6 [shape = 'u8[131072]{0}', space=vmem, size = 0x20000, scoped, tag = 'input window, operand 0']
    #allocation7 [shape = 's32[2]{0}', space=sflag, size = 0x8, scoped, tag = 'scoped memory for tpu_custom_call.1']
    #allocation8 [shape = 's32[2]{0}', space=sflag, size = 0x8, scoped, tag = 'scoped memory for tpu_custom_call.1']
    #allocation9 [shape = 'u8[131072]{0}', space=vmem, size = 0x20000, scoped, tag = 'output window, operand 0']
    %12 = vsyncpa [#allocation7], 0
    %s13 = scalar_lea.sflag [#allocation7], 1
    %14 = vsyncpa %s13, 0
    %15 = vsyncpa [#allocation8], 0
    %s16 = scalar_lea.sflag [#allocation8], 1
    %17 = vsyncpa %s16, 0
    loop: start=0, step=1, limit=10
    $region2: #{tpu_custom_call.1} parent=1 // loop_pre_header
      _
    $region3: #{tpu_custom_call.1} parent=1 // loop_header
      %s19 = sphi 0, %s23
      %p20 = scmp.ge.s32.totalorder %s19, 10
      %s26 = sphi 0, %s45
      %s27 = sphi 0, %s41
      %s28 = sphi 0, %s37
      %s29 = sphi 0, %s26
      %s30 = sphi 0, %s27
      %s31 = sphi 0, %s28
      %s32 = sphi 0, %s29
      %s33 = sphi 0, %s30
      %s34 = sphi 0, %s31
      %s56 = sphi 0, %s58
      %s59 = sphi 0, %s56
      %s60 = sphi 0, %s59
      %s76 = sphi 0, %s60
      %s80 = sphi 0, %s80
      %s82 = sphi 0, %s80
      %s83 = sphi 0, %s82
      %s97 = sphi 0, %s83
      %s101 = sphi 0, %s101
      %s103 = sphi 0, %s101
      %s104 = sphi 0, %s103
      %s118 = sphi 0, %s104
      %s122 = sphi 0, %s122
      %s124 = sphi 0, %s122
      %s125 = sphi 0, %s124
      %s139 = sphi 0, %s125
      %s143 = sphi 0, %s143
      %s145 = sphi 0, %s143
      %s146 = sphi 0, %s145
      %s160 = sphi 0, %s146
      %s164 = sphi 0, %s164
      %s166 = sphi 0, %s164
      %s167 = sphi 0, %s166
      %s181 = sphi 0, %s167
      %s185 = sphi 0, %s185
      %s187 = sphi 0, %s185
      %s188 = sphi 0, %s187
      %s202 = sphi 0, %s188
      %s212 = sphi 0, %s214
      %s215 = sphi 0, %s212
      %s216 = sphi 0, %s215
      %s232 = sphi 0, %s216
    $region4: #{tpu_custom_call.1} parent=1 // loop_header_branch
      %22 = sbr.rel (%p20) target = $region8
    $region5: #{tpu_custom_call.1} parent=1 // loop_body
      %s24 = ssub.s32 %s19, 1
      %s25 = ssub.s32 %s19, 2
      %s35 = sadd.s32 1, %s28
      %p36 = scmp.ge.s32.totalorder %s35, 2
      %s37 = scalar_select %p36, 0, %s35
      %s38 = sadd.s32 1, %s27
      %s39 = scalar_select %p36, %s38, %s27
      %p40 = scmp.ge.s32.totalorder %s39, 2
      %s41 = scalar_select %p40, 0, %s39
      %s42 = sadd.s32 1, %s26
      %s43 = scalar_select %p40, %s42, %s26
      %p44 = scmp.ge.s32.totalorder %s43, 2
      %s45 = scalar_select %p44, 0, %s43
      %s46 = ssub.s32 1, %s27
      %s47 = smul.u32 %s28, %s46
      %s48 = sadd.s32 %s47, %s27
      %s49 = ssub.s32 1, %s41
      %s50 = smul.u32 %s37, %s49
      %s51 = sadd.s32 %s50, %s41
      %s52 = ssub.s32 %s26, %s45
      %s53 = ssub.s32 %s48, %s51
      %s54 = sor.u32 %s52, %s53
      %p55 = scmp.eq.s32.totalorder %s54, 0
      %s57 = sadd.s32 %s56, 1
      %s58 = scalar_select %p55, %s56, %s57
      %p61 = pneg %p55
      %p62 = scmp.eq.s32.totalorder %s19, 7
      %p63 = por %p61, %p62
      %p64 = scmp.ne.s32.totalorder %s56, %s59
      %p65 = scmp.eq.s32.totalorder %s19, 0
      %p66 = por %p64, %p65
      %p67 = scmp.ne.s32.totalorder %s56, %s59
      %p68 = scmp.eq.s32.totalorder %s24, 7
      %p69 = por %p67, %p68
      %p70 = scmp.ne.s32.totalorder %s59, %s60
      %p71 = scmp.eq.s32.totalorder %s24, 0
      %p72 = por %p70, %p71
      %p73 = scmp.ne.s32.totalorder %s59, %s60
      %p74 = scmp.eq.s32.totalorder %s25, 7
      %p75 = por %p73, %p74
      %p77 = scmp.ne.s32.totalorder %s60, %s76
      %p78 = scmp.eq.s32.totalorder %s25, 0
      %p79 = por %p77, %p78
      %s81 = sadd.s32 %s80, 1
      %p84 = scmp.eq.s32.totalorder %s19, 7
      %p85 = scmp.ne.s32.totalorder %s80, %s82
      %p86 = scmp.eq.s32.totalorder %s19, 0
      %p87 = por %p85, %p86
      %p88 = scmp.ne.s32.totalorder %s80, %s82
      %p89 = scmp.eq.s32.totalorder %s24, 7
      %p90 = por %p88, %p89
      %p91 = scmp.ne.s32.totalorder %s82, %s83
      %p92 = scmp.eq.s32.totalorder %s24, 0
      %p93 = por %p91, %p92
      %p94 = scmp.ne.s32.totalorder %s82, %s83
      %p95 = scmp.eq.s32.totalorder %s25, 7
      %p96 = por %p94, %p95
      %p98 = scmp.ne.s32.totalorder %s83, %s97
      %p99 = scmp.eq.s32.totalorder %s25, 0
      %p100 = por %p98, %p99
      %s102 = sadd.s32 %s101, 1
      %p105 = scmp.eq.s32.totalorder %s19, 7
      %p106 = scmp.ne.s32.totalorder %s101, %s103
      %p107 = scmp.eq.s32.totalorder %s19, 0
      %p108 = por %p106, %p107
      %p109 = scmp.ne.s32.totalorder %s101, %s103
      %p110 = scmp.eq.s32.totalorder %s24, 7
      %p111 = por %p109, %p110
      %p112 = scmp.ne.s32.totalorder %s103, %s104
      %p113 = scmp.eq.s32.totalorder %s24, 0
      %p114 = por %p112, %p113
      %p115 = scmp.ne.s32.totalorder %s103, %s104
      %p116 = scmp.eq.s32.totalorder %s25, 7
      %p117 = por %p115, %p116
      %p119 = scmp.ne.s32.totalorder %s104, %s118
      %p120 = scmp.eq.s32.totalorder %s25, 0
      %p121 = por %p119, %p120
      %s123 = sadd.s32 %s122, 1
      %p126 = scmp.eq.s32.totalorder %s19, 7
      %p127 = scmp.ne.s32.totalorder %s122, %s124
      %p128 = scmp.eq.s32.totalorder %s19, 0
      %p129 = por %p127, %p128
      %p130 = scmp.ne.s32.totalorder %s122, %s124
      %p131 = scmp.eq.s32.totalorder %s24, 7
      %p132 = por %p130, %p131
      %p133 = scmp.ne.s32.totalorder %s124, %s125
      %p134 = scmp.eq.s32.totalorder %s24, 0
      %p135 = por %p133, %p134
      %p136 = scmp.ne.s32.totalorder %s124, %s125
      %p137 = scmp.eq.s32.totalorder %s25, 7
      %p138 = por %p136, %p137
      %p140 = scmp.ne.s32.totalorder %s125, %s139
      %p141 = scmp.eq.s32.totalorder %s25, 0
      %p142 = por %p140, %p141
      %s144 = sadd.s32 %s143, 1
      %p147 = scmp.eq.s32.totalorder %s19, 7
      %p148 = scmp.ne.s32.totalorder %s143, %s145
      %p149 = scmp.eq.s32.totalorder %s19, 0
      %p150 = por %p148, %p149
      %p151 = scmp.ne.s32.totalorder %s143, %s145
      %p152 = scmp.eq.s32.totalorder %s24, 7
      %p153 = por %p151, %p152
      %p154 = scmp.ne.s32.totalorder %s145, %s146
      %p155 = scmp.eq.s32.totalorder %s24, 0
      %p156 = por %p154, %p155
      %p157 = scmp.ne.s32.totalorder %s145, %s146
      %p158 = scmp.eq.s32.totalorder %s25, 7
      %p159 = por %p157, %p158
      %p161 = scmp.ne.s32.totalorder %s146, %s160
      %p162 = scmp.eq.s32.totalorder %s25, 0
      %p163 = por %p161, %p162
      %s165 = sadd.s32 %s164, 1
      %p168 = scmp.eq.s32.totalorder %s19, 7
      %p169 = scmp.ne.s32.totalorder %s164, %s166
      %p170 = scmp.eq.s32.totalorder %s19, 0
      %p171 = por %p169, %p170
      %p172 = scmp.ne.s32.totalorder %s164, %s166
      %p173 = scmp.eq.s32.totalorder %s24, 7
      %p174 = por %p172, %p173
      %p175 = scmp.ne.s32.totalorder %s166, %s167
      %p176 = scmp.eq.s32.totalorder %s24, 0
      %p177 = por %p175, %p176
      %p178 = scmp.ne.s32.totalorder %s166, %s167
      %p179 = scmp.eq.s32.totalorder %s25, 7
      %p180 = por %p178, %p179
      %p182 = scmp.ne.s32.totalorder %s167, %s181
      %p183 = scmp.eq.s32.totalorder %s25, 0
      %p184 = por %p182, %p183
      %s186 = sadd.s32 %s185, 1
      %p189 = scmp.eq.s32.totalorder %s19, 7
      %p190 = scmp.ne.s32.totalorder %s185, %s187
      %p191 = scmp.eq.s32.totalorder %s19, 0
      %p192 = por %p190, %p191
      %p193 = scmp.ne.s32.totalorder %s185, %s187
      %p194 = scmp.eq.s32.totalorder %s24, 7
      %p195 = por %p193, %p194
      %p196 = scmp.ne.s32.totalorder %s187, %s188
      %p197 = scmp.eq.s32.totalorder %s24, 0
      %p198 = por %p196, %p197
      %p199 = scmp.ne.s32.totalorder %s187, %s188
      %p200 = scmp.eq.s32.totalorder %s25, 7
      %p201 = por %p199, %p200
      %p203 = scmp.ne.s32.totalorder %s188, %s202
      %p204 = scmp.eq.s32.totalorder %s25, 0
      %p205 = por %p203, %p204
      %s206 = smul.u32 %s28, %s27
      %s207 = smul.u32 %s37, %s41
      %s208 = ssub.s32 %s26, %s45
      %s209 = ssub.s32 %s206, %s207
      %s210 = sor.u32 %s208, %s209
      %p211 = scmp.eq.s32.totalorder %s210, 0
      %s213 = sadd.s32 %s212, 1
      %s214 = scalar_select %p211, %s212, %s213
      %p217 = pneg %p211
      %p218 = scmp.eq.s32.totalorder %s19, 7
      %p219 = por %p217, %p218
      %p220 = scmp.ne.s32.totalorder %s212, %s215
      %p221 = scmp.eq.s32.totalorder %s19, 0
      %p222 = por %p220, %p221
      %p223 = scmp.ne.s32.totalorder %s212, %s215
      %p224 = scmp.eq.s32.totalorder %s24, 7
      %p225 = por %p223, %p224
      %p226 = scmp.ne.s32.totalorder %s215, %s216
      %p227 = scmp.eq.s32.totalorder %s24, 0
      %p228 = por %p226, %p227
      %p229 = scmp.ne.s32.totalorder %s215, %s216
      %p230 = scmp.eq.s32.totalorder %s25, 7
      %p231 = por %p229, %p230
      %p233 = scmp.ne.s32.totalorder %s216, %s232
      %p234 = scmp.eq.s32.totalorder %s25, 0
      %p235 = por %p233, %p234
      %p236 = scmp.le.s32.totalorder 1, %s19
      %p237 = scmp.lt.s32.totalorder %s19, 9
      %p238 = pnand %p236, %p237
      %p239 = pneg %p238
      // Predicated region
      $region9: #{tpu_custom_call.1} parent=5 // pred_check
        _
      $region10: #{tpu_custom_call.1} parent=5 // pred_check_branch
        %241 = sbr.rel (%p238) target = $region12
      $region11: #{tpu_custom_call.1} parent=5 // pred_region
        %s242 = ssub.s32 %s19, 1
        // Predicated region
        $region13: #{tpu_custom_call.1} parent=11 // pred_check
          %p243 = pneg %p93
        $region14: #{tpu_custom_call.1} parent=11 // pred_check_branch
          %245 = sbr.rel (%p243) target = $region16
        $region15: #{tpu_custom_call.1} parent=11 // pred_region
          _
        $region16: #{tpu_custom_call.1} parent=11 // pred_fallthru
          _
        // Predicated region
        $region17: #{tpu_custom_call.1} parent=11 // pred_check
          %p246 = pneg %p114
        $region18: #{tpu_custom_call.1} parent=11 // pred_check_branch
          %248 = sbr.rel (%p246) target = $region20
        $region19: #{tpu_custom_call.1} parent=11 // pred_region
          _
        $region20: #{tpu_custom_call.1} parent=11 // pred_fallthru
          _
        // Predicated region
        $region21: #{tpu_custom_call.1} parent=11 // pred_check
          %p249 = pneg %p135
        $region22: #{tpu_custom_call.1} parent=11 // pred_check_branch
          %251 = sbr.rel (%p249) target = $region24
        $region23: #{tpu_custom_call.1} parent=11 // pred_region
          _
        $region24: #{tpu_custom_call.1} parent=11 // pred_fallthru
          _
        // Predicated region
        $region25: #{tpu_custom_call.1} parent=11 // pred_check
          %p252 = pneg %p156
        $region26: #{tpu_custom_call.1} parent=11 // pred_check_branch
          %254 = sbr.rel (%p252) target = $region28
        $region27: #{tpu_custom_call.1} parent=11 // pred_region
          _
        $region28: #{tpu_custom_call.1} parent=11 // pred_fallthru
          _
        // Predicated region
        $region29: #{tpu_custom_call.1} parent=11 // pred_check
          %p255 = pneg %p177
        $region30: #{tpu_custom_call.1} parent=11 // pred_check_branch
          %257 = sbr.rel (%p255) target = $region32
        $region31: #{tpu_custom_call.1} parent=11 // pred_region
          _
        $region32: #{tpu_custom_call.1} parent=11 // pred_fallthru
          _
        // Predicated region
        $region33: #{tpu_custom_call.1} parent=11 // pred_check
          %p258 = pneg %p198
        $region34: #{tpu_custom_call.1} parent=11 // pred_check_branch
          %260 = sbr.rel (%p258) target = $region36
        $region35: #{tpu_custom_call.1} parent=11 // pred_region
          _
        $region36: #{tpu_custom_call.1} parent=11 // pred_fallthru
          _
      $region12: #{tpu_custom_call.1} parent=5 // pred_fallthru
        _
      %p261 = scmp.lt.s32.totalorder %s19, 8
      // Predicated region
      $region37: #{tpu_custom_call.1} parent=5 // pred_check
        %p262 = pneg %p261
      $region38: #{tpu_custom_call.1} parent=5 // pred_check_branch
        %264 = sbr.rel (%p262) target = $region40
      $region39: #{tpu_custom_call.1} parent=5 // pred_region
        // Predicated region
        $region41: #{tpu_custom_call.1} parent=39 // pred_check
          %p265 = pneg %p66
        $region42: #{tpu_custom_call.1} parent=39 // pred_check_branch
          %267 = sbr.rel (%p265) target = $region44
        $region43: #{tpu_custom_call.1} parent=39 // pred_region
          %s268 = sand.u32 %s56, 1
          %s269 = scalar_lea.sflag [#allocation7], %s268
          %s270 = sand.u32 %s56, 1
          %s271 = smul.addr %s270, 128
          %s272 = scalar_lea.vmem [#allocation6], %s271
          %s273 = ssub.s32 1, %s27
          %s274 = smul.u32 %s28, %s273
          %s275 = sadd.s32 %s274, %s27
          %s277 = ssub.s32 2048, 2048
          %278 = vsyncadd %s269, %s277
          %s279 = smul.addr %s26, 32
          %s280 = sadd.s32 %s275, %s279
          %s281 = smul.addr %s280, 128
          %s282 = scalar_lea.hbm %s0, %s281
          %s283 = sshll.u32 %s272, 4
          %s284 = int_to_ptr.vmem [resolvable:$true] %s283
          %289 = dma.hbm_to_vmem [thread:$0]  %s282, 2048, %s284, %s269, 256, 128, 8
        $region44: #{tpu_custom_call.1} parent=39 // pred_fallthru
          _
      $region40: #{tpu_custom_call.1} parent=5 // pred_fallthru
        _
      %p290 = scmp.le.s32.totalorder 1, %s19
      %p291 = scmp.lt.s32.totalorder %s19, 9
      %p292 = pnand %p290, %p291
      %p293 = pneg %p292
      // Predicated region
      $region45: #{tpu_custom_call.1} parent=5 // pred_check
        _
      $region46: #{tpu_custom_call.1} parent=5 // pred_check_branch
        %295 = sbr.rel (%p292) target = $region48
      $region47: #{tpu_custom_call.1} parent=5 // pred_region
        %s296 = ssub.s32 %s19, 1
        %s297 = sand.u32 %s59, 1
        %s298 = scalar_lea.sflag [#allocation7], %s297
        %s299 = sand.u32 %s59, 1
        %s300 = smul.addr %s299, 128
        %s301 = scalar_lea.vmem [#allocation6], %s300
        // Predicated region
        $region49: #{tpu_custom_call.1} parent=47 // pred_check
          %p302 = pneg %p72
        $region50: #{tpu_custom_call.1} parent=47 // pred_check_branch
          %304 = sbr.rel (%p302) target = $region52
        $region51: #{tpu_custom_call.1} parent=47 // pred_region
          %305 = dma.done %s298, 2048
        $region52: #{tpu_custom_call.1} parent=47 // pred_fallthru
          _
        %s306 = sand.u32 %s59, 1
        %s307 = scalar_lea.sflag [#allocation7], %s306
        %s308 = sand.u32 %s59, 1
        %s309 = smul.addr %s308, 128
        %s310 = scalar_lea.vmem [#allocation6], %s309
        %p311 = pneg %p72
        %p312 = pneg %p69
        %p313 = pneg %p93
        %p314 = pneg %p90
        %p315 = pneg %p114
        %p316 = pneg %p111
        %p317 = pneg %p135
        %p318 = pneg %p132
        %p319 = pneg %p156
        %p320 = pneg %p153
        %p321 = pneg %p177
        %p322 = pneg %p174
        %p323 = pneg %p198
        %p324 = pneg %p195
        %p325 = pneg %p228
        %p326 = pneg %p225
        %s327 = sand.u32 %s215, 1
        %s328 = scalar_lea.sflag [#allocation8], %s327
        %s329 = sand.u32 %s215, 1
        %s330 = smul.addr %s329, 128
        %s331 = scalar_lea.vmem [#allocation9], %s330
        %s332 = ssub.s32 1, %s30
        %s333 = smul.u32 %s31, %s332
        %s334 = sadd.s32 %s333, %s30
        %s335 = smul.u32 %s31, %s30
        %s336 = smul.u32 16, %s335
        %s337 = smul.u32 %s31, 128
        %p338 = scmp.eq.s32.totalorder %s30, 0
        %p339 = scmp.eq.s32.totalorder %s31, 0
        %p340 = pnand %p338, %p339
        %p341 = pneg %p340
        // Predicated region
        $region53: #{tpu_custom_call.1} parent=47 // pred_check
          _
        $region54: #{tpu_custom_call.1} parent=47 // pred_check_branch
          %343 = sbr.rel (%p340) target = $region56
        $region55: #{tpu_custom_call.1} parent=47 // pred_region
          %vm344 = vcmask 7168
          %345 = vst.msk [vmem:[#allocation3] sm:$0xff] %vm344, 0.0
          %346 = vst.msk [vmem:[#allocation3 + $0x8] sm:$0xff] %vm344, 0.0
          %347 = vst.msk [vmem:[#allocation3 + $0x10] sm:$0xff] %vm344, 0.0
          %348 = vst.msk [vmem:[#allocation3 + $0x18] sm:$0xff] %vm344, 0.0
          %349 = vst.msk [vmem:[#allocation3 + $0x20] sm:$0xff] %vm344, 0.0
          %350 = vst.msk [vmem:[#allocation3 + $0x28] sm:$0xff] %vm344, 0.0
          %351 = vst.msk [vmem:[#allocation3 + $0x30] sm:$0xff] %vm344, 0.0
          %352 = vst.msk [vmem:[#allocation3 + $0x38] sm:$0xff] %vm344, 0.0
          %353 = vst.msk [vmem:[#allocation3 + $0x40] sm:$0xff] %vm344, 0.0
          %354 = vst.msk [vmem:[#allocation3 + $0x48] sm:$0xff] %vm344, 0.0
          %355 = vst.msk [vmem:[#allocation3 + $0x50] sm:$0xff] %vm344, 0.0
          %356 = vst.msk [vmem:[#allocation3 + $0x58] sm:$0xff] %vm344, 0.0
          %357 = vst.msk [vmem:[#allocation3 + $0x60] sm:$0xff] %vm344, 0.0
          %358 = vst.msk [vmem:[#allocation3 + $0x68] sm:$0xff] %vm344, 0.0
          %359 = vst.msk [vmem:[#allocation3 + $0x70] sm:$0xff] %vm344, 0.0
          %360 = vst.msk [vmem:[#allocation3 + $0x78] sm:$0xff] %vm344, 0.0
        $region56: #{tpu_custom_call.1} parent=47 // pred_fallthru
          _
        // Predicated region
        $region57: #{tpu_custom_call.1} parent=47 // pred_check
          %p361 = pneg %p338
        $region58: #{tpu_custom_call.1} parent=47 // pred_check_branch
          %363 = sbr.rel (%p361) target = $region60
        $region59: #{tpu_custom_call.1} parent=47 // pred_region
          %v364 = vld [vmem:[%s301] sm:$0xff]
          %v365 = vld [vmem:[%s301 + $0x8] sm:$0xff]
          %v366 = vld [vmem:[%s301 + $0x10] sm:$0xff]
          %v367 = vld [vmem:[%s301 + $0x18] sm:$0xff]
          %v368 = vld [vmem:[%s301 + $0x20] sm:$0xff]
          %v369 = vld [vmem:[%s301 + $0x28] sm:$0xff]
          %v370 = vld [vmem:[%s301 + $0x30] sm:$0xff]
          %v371 = vld [vmem:[%s301 + $0x38] sm:$0xff]
          %v372 = vld [vmem:[%s301 + $0x40] sm:$0xff]
          %v373 = vld [vmem:[%s301 + $0x48] sm:$0xff]
          %v374 = vld [vmem:[%s301 + $0x50] sm:$0xff]
          %v375 = vld [vmem:[%s301 + $0x58] sm:$0xff]
          %v376 = vld [vmem:[%s301 + $0x60] sm:$0xff]
          %v377 = vld [vmem:[%s301 + $0x68] sm:$0xff]
          %v378 = vld [vmem:[%s301 + $0x70] sm:$0xff]
          %v379 = vld [vmem:[%s301 + $0x78] sm:$0xff]
          %v380 = vld [vmem:[%s1] sm:$0xff]
          %381 = vmatprep.subr.mxu0 0.0
          %382 = vmatpush1.msra.mxu0 %v379
          %383 = vmatprep.subr.mxu0 0.0
          %384 = vmatpush1.msra.mxu0 %v378
          %385 = vmatprep.subr.mxu0 0.0
          %386 = vmatpush1.msra.mxu0 %v377
          %387 = vmatprep.subr.mxu0 0.0
          %388 = vmatpush1.msra.mxu0 %v376
          %389 = vmatprep.subr.mxu0 0.0
          %390 = vmatpush1.msra.mxu0 %v375
          %391 = vmatprep.subr.mxu0 0.0
          %392 = vmatpush1.msra.mxu0 %v374
          %393 = vmatprep.subr.mxu0 0.0
          %394 = vmatpush1.msra.mxu0 %v373
          %395 = vmatprep.subr.mxu0 0.0
          %396 = vmatpush1.msra.mxu0 %v372
          %397 = vmatprep.subr.mxu0 0.0
          %398 = vmatpush1.msra.mxu0 %v371
          %399 = vmatprep.subr.mxu0 0.0
          %400 = vmatpush1.msra.mxu0 %v370
          %401 = vmatprep.subr.mxu0 0.0
          %402 = vmatpush1.msra.mxu0 %v369
          %403 = vmatprep.subr.mxu0 0.0
          %404 = vmatpush1.msra.mxu0 %v368
          %405 = vmatprep.subr.mxu0 0.0
          %406 = vmatpush1.msra.mxu0 %v367
          %407 = vmatprep.subr.mxu0 0.0
          %408 = vmatpush1.msra.mxu0 %v366
          %409 = vmatprep.subr.mxu0 0.0
          %410 = vmatpush1.msra.mxu0 %v365
          %411 = vmatprep.subr.mxu0 0.0
          %412 = vmatpush1.msra.mxu0 %v364
          %413 = vmatprep.subr.mxu0 0.0
          %414 = vmatpush2.msra.mxu0 0.0
          %415 = vmatprep.subr.mxu0 0.0
          %416 = vmatpush2.msra.mxu0 0.0
          %417 = vmatprep.subr.mxu0 0.0
          %418 = vmatpush2.msra.mxu0 0.0
          %419 = vmatprep.subr.mxu0 0.0
          %420 = vmatpush2.msra.mxu0 0.0
          %421 = vmatprep.subr.mxu0 0.0
          %422 = vmatpush2.msra.mxu0 0.0
          %423 = vmatprep.subr.mxu0 0.0
          %424 = vmatpush2.msra.mxu0 0.0
          %425 = vmatprep.subr.mxu0 0.0
          %426 = vmatpush2.msra.mxu0 0.0
          %427 = vmatprep.subr.mxu0 0.0
          %428 = vmatpush2.msra.mxu0 0.0
          %429 = vmatprep.subr.mxu0 0.0
          %430 = vmatpush2.msra.mxu0 0.0
          %431 = vmatprep.subr.mxu0 0.0
          %432 = vmatpush2.msra.mxu0 0.0
          %433 = vmatprep.subr.mxu0 0.0
          %434 = vmatpush2.msra.mxu0 0.0
          %435 = vmatprep.subr.mxu0 0.0
          %436 = vmatpush2.msra.mxu0 0.0
          %437 = vmatprep.subr.mxu0 0.0
          %438 = vmatpush2.msra.mxu0 0.0
          %439 = vmatprep.subr.mxu0 0.0
          %440 = vmatpush2.msra.mxu0 0.0
          %441 = vmatprep.subr.mxu0 0.0
          %442 = vmatpush2.msra.mxu0 0.0
          %443 = vmatprep.subr.mxu0 0.0
          %444 = vmatpush2.msra.mxu0 0.0
          %445 = vmatprep.mubr.f32.mxu0 0.0
          %446 = vmatmul.mubr.f32.gmra.mxu0 %v380
          %v447 = vpop.f32.mrf.mxu0
          %v448 = vadd.f32 0.0, %v447
          %v449 = vpop.f32.mrf.mxu0
          %450 = vdwg.mxu0
          %s451 = sshra.s32 %s337, 7
          %s452 = sand.u32 %s337, 127
          %s453 = smul.addr %s451, 8
          %s454 = scalar_lea.vmem [#allocation2], %s453
          %455 = vst [vmem:[%s454] sm:$0xff] %v448
          %v456 = vld [vmem:[#allocation3] sm:$0xff]
          %v457 = vld [vmem:[#allocation3 + $0x8] sm:$0xff]
          %v458 = vld [vmem:[#allocation3 + $0x10] sm:$0xff]
          %v459 = vld [vmem:[#allocation3 + $0x18] sm:$0xff]
          %v460 = vld [vmem:[#allocation3 + $0x20] sm:$0xff]
          %v461 = vld [vmem:[#allocation3 + $0x28] sm:$0xff]
          %v462 = vld [vmem:[#allocation3 + $0x30] sm:$0xff]
          %v463 = vld [vmem:[#allocation3 + $0x38] sm:$0xff]
          %v464 = vld [vmem:[#allocation3 + $0x40] sm:$0xff]
          %v465 = vld [vmem:[#allocation3 + $0x48] sm:$0xff]
          %v466 = vld [vmem:[#allocation3 + $0x50] sm:$0xff]
          %v467 = vld [vmem:[#allocation3 + $0x58] sm:$0xff]
          %v468 = vld [vmem:[#allocation3 + $0x60] sm:$0xff]
          %v469 = vld [vmem:[#allocation3 + $0x68] sm:$0xff]
          %v470 = vld [vmem:[#allocation3 + $0x70] sm:$0xff]
          %v471 = vld [vmem:[#allocation3 + $0x78] sm:$0xff]
          %472 = vadd.xlane.f32.xlu0 %v364
          %v473 = vpop.xlane.xlu0 %472
          %474 = vadd.xlane.f32.xlu0 %v365
          %v475 = vpop.xlane.xlu0 %474
          %476 = vadd.xlane.f32.xlu0 %v366
          %v477 = vpop.xlane.xlu0 %476
          %478 = vadd.xlane.f32.xlu0 %v367
          %v479 = vpop.xlane.xlu0 %478
          %480 = vadd.xlane.f32.xlu0 %v368
          %v481 = vpop.xlane.xlu0 %480
          %482 = vadd.xlane.f32.xlu0 %v369
          %v483 = vpop.xlane.xlu0 %482
          %484 = vadd.xlane.f32.xlu0 %v370
          %v485 = vpop.xlane.xlu0 %484
          %486 = vadd.xlane.f32.xlu0 %v371
          %v487 = vpop.xlane.xlu0 %486
          %488 = vadd.xlane.f32.xlu0 %v372
          %v489 = vpop.xlane.xlu0 %488
          %490 = vadd.xlane.f32.xlu0 %v373
          %v491 = vpop.xlane.xlu0 %490
          %492 = vadd.xlane.f32.xlu0 %v374
          %v493 = vpop.xlane.xlu0 %492
          %494 = vadd.xlane.f32.xlu0 %v375
          %v495 = vpop.xlane.xlu0 %494
          %496 = vadd.xlane.f32.xlu0 %v376
          %v497 = vpop.xlane.xlu0 %496
          %498 = vadd.xlane.f32.xlu0 %v377
          %v499 = vpop.xlane.xlu0 %498
          %500 = vadd.xlane.f32.xlu0 %v378
          %v501 = vpop.xlane.xlu0 %500
          %502 = vadd.xlane.f32.xlu0 %v379
          %v503 = vpop.xlane.xlu0 %502
          %v504 = vadd.f32 %v456, %v473
          %v505 = vadd.f32 %v457, %v475
          %v506 = vadd.f32 %v458, %v477
          %v507 = vadd.f32 %v459, %v479
          %v508 = vadd.f32 %v460, %v481
          %v509 = vadd.f32 %v461, %v483
          %v510 = vadd.f32 %v462, %v485
          %v511 = vadd.f32 %v463, %v487
          %v512 = vadd.f32 %v464, %v489
          %v513 = vadd.f32 %v465, %v491
          %v514 = vadd.f32 %v466, %v493
          %v515 = vadd.f32 %v467, %v495
          %v516 = vadd.f32 %v468, %v497
          %v517 = vadd.f32 %v469, %v499
          %v518 = vadd.f32 %v470, %v501
          %v519 = vadd.f32 %v471, %v503
          %vm520 = vcmask 7168
          %521 = vst.msk [vmem:[#allocation3] sm:$0xff] %vm520, %v504
          %522 = vst.msk [vmem:[#allocation3 + $0x8] sm:$0xff] %vm520, %v505
          %523 = vst.msk [vmem:[#allocation3 + $0x10] sm:$0xff] %vm520, %v506
          %524 = vst.msk [vmem:[#allocation3 + $0x18] sm:$0xff] %vm520, %v507
          %525 = vst.msk [vmem:[#allocation3 + $0x20] sm:$0xff] %vm520, %v508
          %526 = vst.msk [vmem:[#allocation3 + $0x28] sm:$0xff] %vm520, %v509
          %527 = vst.msk [vmem:[#allocation3 + $0x30] sm:$0xff] %vm520, %v510
          %528 = vst.msk [vmem:[#allocation3 + $0x38] sm:$0xff] %vm520, %v511
          %529 = vst.msk [vmem:[#allocation3 + $0x40] sm:$0xff] %vm520, %v512
          %530 = vst.msk [vmem:[#allocation3 + $0x48] sm:$0xff] %vm520, %v513
          %531 = vst.msk [vmem:[#allocation3 + $0x50] sm:$0xff] %vm520, %v514
          %532 = vst.msk [vmem:[#allocation3 + $0x58] sm:$0xff] %vm520, %v515
          %533 = vst.msk [vmem:[#allocation3 + $0x60] sm:$0xff] %vm520, %v516
          %534 = vst.msk [vmem:[#allocation3 + $0x68] sm:$0xff] %vm520, %v517
          %535 = vst.msk [vmem:[#allocation3 + $0x70] sm:$0xff] %vm520, %v518
          %536 = vst.msk [vmem:[#allocation3 + $0x78] sm:$0xff] %vm520, %v519
        $region60: #{tpu_custom_call.1} parent=47 // pred_fallthru
          _
        %p537 = scmp.eq.s32.totalorder %s30, 1
        %p538 = pnand %p537, %p339
        %p539 = pneg %p538
        // Predicated region
        $region61: #{tpu_custom_call.1} parent=47 // pred_check
          _
        $region62: #{tpu_custom_call.1} parent=47 // pred_check_branch
          %541 = sbr.rel (%p538) target = $region64
        $region63: #{tpu_custom_call.1} parent=47 // pred_region
          %v542 = vld [vmem:[#allocation3] sm:$0xff]
          %v543 = vld [vmem:[#allocation3 + $0x8] sm:$0xff]
          %v544 = vld [vmem:[#allocation3 + $0x10] sm:$0xff]
          %v545 = vld [vmem:[#allocation3 + $0x18] sm:$0xff]
          %v546 = vld [vmem:[#allocation3 + $0x20] sm:$0xff]
          %v547 = vld [vmem:[#allocation3 + $0x28] sm:$0xff]
          %v548 = vld [vmem:[#allocation3 + $0x30] sm:$0xff]
          %v549 = vld [vmem:[#allocation3 + $0x38] sm:$0xff]
          %v550 = vld [vmem:[#allocation3 + $0x40] sm:$0xff]
          %v551 = vld [vmem:[#allocation3 + $0x48] sm:$0xff]
          %v552 = vld [vmem:[#allocation3 + $0x50] sm:$0xff]
          %v553 = vld [vmem:[#allocation3 + $0x58] sm:$0xff]
          %v554 = vld [vmem:[#allocation3 + $0x60] sm:$0xff]
          %v555 = vld [vmem:[#allocation3 + $0x68] sm:$0xff]
          %v556 = vld [vmem:[#allocation3 + $0x70] sm:$0xff]
          %v557 = vld [vmem:[#allocation3 + $0x78] sm:$0xff]
          %v558 = vmul.f32 %v542, 0.00390625
          %v559 = vmul.f32 %v543, 0.00390625
          %v560 = vmul.f32 %v544, 0.00390625
          %v561 = vmul.f32 %v545, 0.00390625
          %v562 = vmul.f32 %v546, 0.00390625
          %v563 = vmul.f32 %v547, 0.00390625
          %v564 = vmul.f32 %v548, 0.00390625
          %v565 = vmul.f32 %v549, 0.00390625
          %v566 = vmul.f32 %v550, 0.00390625
          %v567 = vmul.f32 %v551, 0.00390625
          %v568 = vmul.f32 %v552, 0.00390625
          %v569 = vmul.f32 %v553, 0.00390625
          %v570 = vmul.f32 %v554, 0.00390625
          %v571 = vmul.f32 %v555, 0.00390625
          %v572 = vmul.f32 %v556, 0.00390625
          %v573 = vmul.f32 %v557, 0.00390625
          %v574 = vld [vmem:[%s3] sm:$0xff]
          %v575 = vld [vmem:[%s4] sm:$0xff]
          %576 = vmatprep.subr.mxu0 0.0
          %577 = vmatpush1.msra.mxu0 %v573
          %578 = vmatprep.subr.mxu0 0.0
          %579 = vmatpush1.msra.mxu0 %v572
          %580 = vmatprep.subr.mxu0 0.0
          %581 = vmatpush1.msra.mxu0 %v571
          %582 = vmatprep.subr.mxu0 0.0
          %583 = vmatpush1.msra.mxu0 %v570
          %584 = vmatprep.subr.mxu0 0.0
          %585 = vmatpush1.msra.mxu0 %v569
          %586 = vmatprep.subr.mxu0 0.0
          %587 = vmatpush1.msra.mxu0 %v568
          %588 = vmatprep.subr.mxu0 0.0
          %589 = vmatpush1.msra.mxu0 %v567
          %590 = vmatprep.subr.mxu0 0.0
          %591 = vmatpush1.msra.mxu0 %v566
          %592 = vmatprep.subr.mxu0 0.0
          %593 = vmatpush1.msra.mxu0 %v565
          %594 = vmatprep.subr.mxu0 0.0
          %595 = vmatpush1.msra.mxu0 %v564
          %596 = vmatprep.subr.mxu0 0.0
          %597 = vmatpush1.msra.mxu0 %v563
          %598 = vmatprep.subr.mxu0 0.0
          %599 = vmatpush1.msra.mxu0 %v562
          %600 = vmatprep.subr.mxu0 0.0
          %601 = vmatpush1.msra.mxu0 %v561
          %602 = vmatprep.subr.mxu0 0.0
          %603 = vmatpush1.msra.mxu0 %v560
          %604 = vmatprep.subr.mxu0 0.0
          %605 = vmatpush1.msra.mxu0 %v559
          %606 = vmatprep.subr.mxu0 0.0
          %607 = vmatpush1.msra.mxu0 %v558
          %608 = vmatprep.subr.mxu0 0.0
          %609 = vmatpush2.msra.mxu0 0.0
          %610 = vmatprep.subr.mxu0 0.0
          %611 = vmatpush2.msra.mxu0 0.0
          %612 = vmatprep.subr.mxu0 0.0
          %613 = vmatpush2.msra.mxu0 0.0
          %614 = vmatprep.subr.mxu0 0.0
          %615 = vmatpush2.msra.mxu0 0.0
          %616 = vmatprep.subr.mxu0 0.0
          %617 = vmatpush2.msra.mxu0 0.0
          %618 = vmatprep.subr.mxu0 0.0
          %619 = vmatpush2.msra.mxu0 0.0
          %620 = vmatprep.subr.mxu0 0.0
          %621 = vmatpush2.msra.mxu0 0.0
          %622 = vmatprep.subr.mxu0 0.0
          %623 = vmatpush2.msra.mxu0 0.0
          %624 = vmatprep.subr.mxu0 0.0
          %625 = vmatpush2.msra.mxu0 0.0
          %626 = vmatprep.subr.mxu0 0.0
          %627 = vmatpush2.msra.mxu0 0.0
          %628 = vmatprep.subr.mxu0 0.0
          %629 = vmatpush2.msra.mxu0 0.0
          %630 = vmatprep.subr.mxu0 0.0
          %631 = vmatpush2.msra.mxu0 0.0
          %632 = vmatprep.subr.mxu0 0.0
          %633 = vmatpush2.msra.mxu0 0.0
          %634 = vmatprep.subr.mxu0 0.0
          %635 = vmatpush2.msra.mxu0 0.0
          %636 = vmatprep.subr.mxu0 0.0
          %637 = vmatpush2.msra.mxu0 0.0
          %638 = vmatprep.subr.mxu0 0.0
          %639 = vmatpush2.msra.mxu0 0.0
          %640 = vmatprep.mubr.f32.mxu0 0.0
          %641 = vmatmul.mubr.f32.gmra.mxu0 %v574
          %v642 = vpop.f32.mrf.mxu0
          %v643 = vadd.f32 %v575, %v642
          %v644 = vpop.f32.mrf.mxu0
          %645 = vdwg.mxu0
          %v646 = vld [vmem:[%s5] sm:$0xff]
          %v647 = vld [vmem:[%s5 + $0x8] sm:$0xff]
          %v648 = vld [vmem:[%s5 + $0x10] sm:$0xff]
          %v649 = vld [vmem:[%s5 + $0x18] sm:$0xff]
          %v650 = vld [vmem:[%s5 + $0x20] sm:$0xff]
          %v651 = vld [vmem:[%s5 + $0x28] sm:$0xff]
          %v652 = vld [vmem:[%s5 + $0x30] sm:$0xff]
          %v653 = vld [vmem:[%s5 + $0x38] sm:$0xff]
          %v654 = vld [vmem:[%s5 + $0x40] sm:$0xff]
          %v655 = vld [vmem:[%s5 + $0x48] sm:$0xff]
          %v656 = vld [vmem:[%s5 + $0x50] sm:$0xff]
          %v657 = vld [vmem:[%s5 + $0x58] sm:$0xff]
          %v658 = vld [vmem:[%s5 + $0x60] sm:$0xff]
          %v659 = vld [vmem:[%s5 + $0x68] sm:$0xff]
          %v660 = vld [vmem:[%s5 + $0x70] sm:$0xff]
          %v661 = vld [vmem:[%s5 + $0x78] sm:$0xff]
          %v662 = vld [vmem:[%s6] sm:$0xff]
          %v663 = vld [vmem:[%s6 + $0x8] sm:$0xff]
          %v664 = vld [vmem:[%s6 + $0x10] sm:$0xff]
          %v665 = vld [vmem:[%s6 + $0x18] sm:$0xff]
          %v666 = vld [vmem:[%s6 + $0x20] sm:$0xff]
          %v667 = vld [vmem:[%s6 + $0x28] sm:$0xff]
          %v668 = vld [vmem:[%s6 + $0x30] sm:$0xff]
          %v669 = vld [vmem:[%s6 + $0x38] sm:$0xff]
          %v670 = vld [vmem:[%s6 + $0x40] sm:$0xff]
          %v671 = vld [vmem:[%s6 + $0x48] sm:$0xff]
          %v672 = vld [vmem:[%s6 + $0x50] sm:$0xff]
          %v673 = vld [vmem:[%s6 + $0x58] sm:$0xff]
          %v674 = vld [vmem:[%s6 + $0x60] sm:$0xff]
          %v675 = vld [vmem:[%s6 + $0x68] sm:$0xff]
          %v676 = vld [vmem:[%s6 + $0x70] sm:$0xff]
          %v677 = vld [vmem:[%s6 + $0x78] sm:$0xff]
          %678 = vmatprep.subr.mxu0 0.0
          %679 = vmatpush1.msra.mxu0 %v573
          %680 = vmatprep.subr.mxu0 0.0
          %681 = vmatpush1.msra.mxu0 %v572
          %682 = vmatprep.subr.mxu0 0.0
          %683 = vmatpush1.msra.mxu0 %v571
          %684 = vmatprep.subr.mxu0 0.0
          %685 = vmatpush1.msra.mxu0 %v570
          %686 = vmatprep.subr.mxu0 0.0
          %687 = vmatpush1.msra.mxu0 %v569
          %688 = vmatprep.subr.mxu0 0.0
          %689 = vmatpush1.msra.mxu0 %v568
          %690 = vmatprep.subr.mxu0 0.0
          %691 = vmatpush1.msra.mxu0 %v567
          %692 = vmatprep.subr.mxu0 0.0
          %693 = vmatpush1.msra.mxu0 %v566
          %694 = vmatprep.subr.mxu0 0.0
          %695 = vmatpush1.msra.mxu0 %v565
          %696 = vmatprep.subr.mxu0 0.0
          %697 = vmatpush1.msra.mxu0 %v564
          %698 = vmatprep.subr.mxu0 0.0
          %699 = vmatpush1.msra.mxu0 %v563
          %700 = vmatprep.subr.mxu0 0.0
          %701 = vmatpush1.msra.mxu0 %v562
          %702 = vmatprep.subr.mxu0 0.0
          %703 = vmatpush1.msra.mxu0 %v561
          %704 = vmatprep.subr.mxu0 0.0
          %705 = vmatpush1.msra.mxu0 %v560
          %706 = vmatprep.subr.mxu0 0.0
          %707 = vmatpush1.msra.mxu0 %v559
          %708 = vmatprep.subr.mxu0 0.0
          %709 = vmatpush1.msra.mxu0 %v558
          %710 = vmatprep.subr.mxu0 0.0
          %711 = vmatpush2.msra.mxu0 0.0
          %712 = vmatprep.subr.mxu0 0.0
          %713 = vmatpush2.msra.mxu0 0.0
          %714 = vmatprep.subr.mxu0 0.0
          %715 = vmatpush2.msra.mxu0 0.0
          %716 = vmatprep.subr.mxu0 0.0
          %717 = vmatpush2.msra.mxu0 0.0
          %718 = vmatprep.subr.mxu0 0.0
          %719 = vmatpush2.msra.mxu0 0.0
          %720 = vmatprep.subr.mxu0 0.0
          %721 = vmatpush2.msra.mxu0 0.0
          %722 = vmatprep.subr.mxu0 0.0
          %723 = vmatpush2.msra.mxu0 0.0
          %724 = vmatprep.subr.mxu0 0.0
          %725 = vmatpush2.msra.mxu0 0.0
          %726 = vmatprep.subr.mxu0 0.0
          %727 = vmatpush2.msra.mxu0 0.0
          %728 = vmatprep.subr.mxu0 0.0
          %729 = vmatpush2.msra.mxu0 0.0
          %730 = vmatprep.subr.mxu0 0.0
          %731 = vmatpush2.msra.mxu0 0.0
          %732 = vmatprep.subr.mxu0 0.0
          %733 = vmatpush2.msra.mxu0 0.0
          %734 = vmatprep.subr.mxu0 0.0
          %735 = vmatpush2.msra.mxu0 0.0
          %736 = vmatprep.subr.mxu0 0.0
          %737 = vmatpush2.msra.mxu0 0.0
          %738 = vmatprep.subr.mxu0 0.0
          %739 = vmatpush2.msra.mxu0 0.0
          %740 = vmatprep.subr.mxu0 0.0
          %741 = vmatpush2.msra.mxu0 0.0
          %742 = vmatprep.mubr.f32.mxu0 0.0
          %743 = vmatmul.mubr.f32.gmra.mxu0 %v646
          %v744 = vpop.f32.mrf.mxu0
          %v745 = vadd.f32 %v662, %v744
          %v746 = vpop.f32.mrf.mxu0
          %747 = vmatprep.mubr.f32.mxu0 0.0
          %748 = vmatmul.mubr.f32.gmra.mxu0 %v647
          %v749 = vpop.f32.mrf.mxu0
          %v750 = vadd.f32 %v663, %v749
          %v751 = vpop.f32.mrf.mxu0
          %752 = vmatprep.mubr.f32.mxu0 0.0
          %753 = vmatmul.mubr.f32.gmra.mxu0 %v648
          %v754 = vpop.f32.mrf.mxu0
          %v755 = vadd.f32 %v664, %v754
          %v756 = vpop.f32.mrf.mxu0
          %757 = vmatprep.mubr.f32.mxu0 0.0
          %758 = vmatmul.mubr.f32.gmra.mxu0 %v649
          %v759 = vpop.f32.mrf.mxu0
          %v760 = vadd.f32 %v665, %v759
          %v761 = vpop.f32.mrf.mxu0
          %762 = vmatprep.mubr.f32.mxu0 0.0
          %763 = vmatmul.mubr.f32.gmra.mxu0 %v650
          %v764 = vpop.f32.mrf.mxu0
          %v765 = vadd.f32 %v666, %v764
          %v766 = vpop.f32.mrf.mxu0
          %767 = vmatprep.mubr.f32.mxu0 0.0
          %768 = vmatmul.mubr.f32.gmra.mxu0 %v651
          %v769 = vpop.f32.mrf.mxu0
          %v770 = vadd.f32 %v667, %v769
          %v771 = vpop.f32.mrf.mxu0
          %772 = vmatprep.mubr.f32.mxu0 0.0
          %773 = vmatmul.mubr.f32.gmra.mxu0 %v652
          %v774 = vpop.f32.mrf.mxu0
          %v775 = vadd.f32 %v668, %v774
          %v776 = vpop.f32.mrf.mxu0
          %777 = vmatprep.mubr.f32.mxu0 0.0
          %778 = vmatmul.mubr.f32.gmra.mxu0 %v653
          %v779 = vpop.f32.mrf.mxu0
          %v780 = vadd.f32 %v669, %v779
          %v781 = vpop.f32.mrf.mxu0
          %782 = vmatprep.mubr.f32.mxu0 0.0
          %783 = vmatmul.mubr.f32.gmra.mxu0 %v654
          %v784 = vpop.f32.mrf.mxu0
          %v785 = vadd.f32 %v670, %v784
          %v786 = vpop.f32.mrf.mxu0
          %787 = vmatprep.mubr.f32.mxu0 0.0
          %788 = vmatmul.mubr.f32.gmra.mxu0 %v655
          %v789 = vpop.f32.mrf.mxu0
          %v790 = vadd.f32 %v671, %v789
          %v791 = vpop.f32.mrf.mxu0
          %792 = vmatprep.mubr.f32.mxu0 0.0
          %793 = vmatmul.mubr.f32.gmra.mxu0 %v656
          %v794 = vpop.f32.mrf.mxu0
          %v795 = vadd.f32 %v672, %v794
          %v796 = vpop.f32.mrf.mxu0
          %797 = vmatprep.mubr.f32.mxu0 0.0
          %798 = vmatmul.mubr.f32.gmra.mxu0 %v657
          %v799 = vpop.f32.mrf.mxu0
          %v800 = vadd.f32 %v673, %v799
          %v801 = vpop.f32.mrf.mxu0
          %802 = vmatprep.mubr.f32.mxu0 0.0
          %803 = vmatmul.mubr.f32.gmra.mxu0 %v658
          %v804 = vpop.f32.mrf.mxu0
          %v805 = vadd.f32 %v674, %v804
          %v806 = vpop.f32.mrf.mxu0
          %807 = vmatprep.mubr.f32.mxu0 0.0
          %808 = vmatmul.mubr.f32.gmra.mxu0 %v659
          %v809 = vpop.f32.mrf.mxu0
          %v810 = vadd.f32 %v675, %v809
          %v811 = vpop.f32.mrf.mxu0
          %812 = vmatprep.mubr.f32.mxu0 0.0
          %813 = vmatmul.mubr.f32.gmra.mxu0 %v660
          %v814 = vpop.f32.mrf.mxu0
          %v815 = vadd.f32 %v676, %v814
          %v816 = vpop.f32.mrf.mxu0
          %817 = vmatprep.mubr.f32.mxu0 0.0
          %818 = vmatmul.mubr.f32.gmra.mxu0 %v661
          %v819 = vpop.f32.mrf.mxu0
          %v820 = vadd.f32 %v677, %v819
          %v821 = vpop.f32.mrf.mxu0
          %822 = vdwg.mxu0
          %823 = vxpose.xlu0.b32.start [1/16] %v745, 128
          %824 = vxpose.xlu0.b32.cont [2/16] %v750, 128
          %825 = vxpose.xlu0.b32.cont [3/16] %v755, 128
          %826 = vxpose.xlu0.b32.cont [4/16] %v760, 128
          %827 = vxpose.xlu0.b32.cont [5/16] %v765, 128
          %828 = vxpose.xlu0.b32.cont [6/16] %v770, 128
          %829 = vxpose.xlu0.b32.cont [7/16] %v775, 128
          %830 = vxpose.xlu0.b32.cont [8/16] %v780, 128
          %831 = vxpose.xlu0.b32.cont [9/16] %v785, 128
          %832 = vxpose.xlu0.b32.cont [10/16] %v790, 128
          %833 = vxpose.xlu0.b32.cont [11/16] %v795, 128
          %834 = vxpose.xlu0.b32.cont [12/16] %v800, 128
          %835 = vxpose.xlu0.b32.cont [13/16] %v805, 128
          %836 = vxpose.xlu0.b32.cont [14/16] %v810, 128
          %837 = vxpose.xlu0.b32.cont [15/16] %v815, 128
          %838 = vxpose.xlu0.b32.end [16/16] %v820, 128
          %v839 = vpop.trf.xlu0
          %v840 = vpop.trf.xlu0
          %v841 = vpop.trf.xlu0
          %v842 = vpop.trf.xlu0
          %v843 = vpop.trf.xlu0
          %v844 = vpop.trf.xlu0
          %v845 = vpop.trf.xlu0
          %v846 = vpop.trf.xlu0
          %v847 = vpop.trf.xlu0
          %v848 = vpop.trf.xlu0
          %v849 = vpop.trf.xlu0
          %v850 = vpop.trf.xlu0
          %v851 = vpop.trf.xlu0
          %v852 = vpop.trf.xlu0
          %v853 = vpop.trf.xlu0
          %v854 = vpop.trf.xlu0
          %855 = vst [vmem:[#allocation4] sm:$0x1] %v839
          %v856 = vld [vmem:[%s2] sm:$0xff]
          %v857 = vmul.f32 %v856, %v643
          %vm858 = vcmask 7168
          %v859 = vsel %vm858, %v857, 0.0
          %v860 = vrot.slane %v859, 4
          %v861 = vadd.f32 %v859, %v860
          %v862 = vrot.slane %v861, 2
          %v863 = vadd.f32 %v861, %v862
          %v864 = vrot.slane %v863, 1
          %v865 = vadd.f32 %v863, %v864
          %866 = vxpose.xlu0.b32.start [1/16] %v643, 128
          %867 = vxpose.xlu0.b32.cont [2/16] 0.0, 128
          %868 = vxpose.xlu0.b32.cont [3/16] 0.0, 128
          %869 = vxpose.xlu0.b32.cont [4/16] 0.0, 128
          %870 = vxpose.xlu0.b32.cont [5/16] 0.0, 128
          %871 = vxpose.xlu0.b32.cont [6/16] 0.0, 128
          %872 = vxpose.xlu0.b32.cont [7/16] 0.0, 128
          %873 = vxpose.xlu0.b32.cont [8/16] 0.0, 128
          %874 = vxpose.xlu0.b32.cont [9/16] 0.0, 128
          %875 = vxpose.xlu0.b32.cont [10/16] 0.0, 128
          %876 = vxpose.xlu0.b32.cont [11/16] 0.0, 128
          %877 = vxpose.xlu0.b32.cont [12/16] 0.0, 128
          %878 = vxpose.xlu0.b32.cont [13/16] 0.0, 128
          %879 = vxpose.xlu0.b32.cont [14/16] 0.0, 128
          %880 = vxpose.xlu0.b32.cont [15/16] 0.0, 128
          %881 = vxpose.xlu0.b32.end [16/16] 0.0, 128
          %v882 = vpop.trf.xlu0
          %v883 = vpop.trf.xlu0
          %v884 = vpop.trf.xlu0
          %v885 = vpop.trf.xlu0
          %v886 = vpop.trf.xlu0
          %v887 = vpop.trf.xlu0
          %v888 = vpop.trf.xlu0
          %v889 = vpop.trf.xlu0
          %v890 = vpop.trf.xlu0
          %v891 = vpop.trf.xlu0
          %v892 = vpop.trf.xlu0
          %v893 = vpop.trf.xlu0
          %v894 = vpop.trf.xlu0
          %v895 = vpop.trf.xlu0
          %v896 = vpop.trf.xlu0
          %v897 = vpop.trf.xlu0
          %v898 = vld [vmem:[#allocation2] sm:$0xff]
          %v899 = vld [vmem:[#allocation2 + $0x8] sm:$0xff]
          %901 = vset.pattern.permute.xlu0 0
          %902 = vperm.xlu0 %901, %v865
          %v903 = vpop.permute.xlu0 %902
          %vm905 = vcmask 64512
          %v907 = vsel %vm905, %v882, 0
          %909 = vmatprep.subr.mxu0 0.0
          %910 = vmatpush1.msra.mxu0 0.0
          %911 = vmatprep.subr.mxu0 0.0
          %912 = vmatpush1.msra.mxu0 0.0
          %913 = vmatprep.subr.mxu0 0.0
          %914 = vmatpush1.msra.mxu0 0.0
          %915 = vmatprep.subr.mxu0 0.0
          %916 = vmatpush1.msra.mxu0 0.0
          %917 = vmatprep.subr.mxu0 0.0
          %918 = vmatpush1.msra.mxu0 0.0
          %919 = vmatprep.subr.mxu0 0.0
          %920 = vmatpush1.msra.mxu0 0.0
          %921 = vmatprep.subr.mxu0 0.0
          %922 = vmatpush1.msra.mxu0 0.0
          %923 = vmatprep.subr.mxu0 0.0
          %924 = vmatpush1.msra.mxu0 0.0
          %925 = vmatprep.subr.mxu0 0.0
          %926 = vmatpush1.msra.mxu0 0.0
          %927 = vmatprep.subr.mxu0 0.0
          %928 = vmatpush1.msra.mxu0 0.0
          %929 = vmatprep.subr.mxu0 0.0
          %930 = vmatpush1.msra.mxu0 0.0
          %931 = vmatprep.subr.mxu0 0.0
          %932 = vmatpush1.msra.mxu0 0.0
          %933 = vmatprep.subr.mxu0 0.0
          %934 = vmatpush1.msra.mxu0 0.0
          %935 = vmatprep.subr.mxu0 0.0
          %936 = vmatpush1.msra.mxu0 0.0
          %937 = vmatprep.subr.mxu0 0.0
          %938 = vmatpush1.msra.mxu0 0.0
          %939 = vmatprep.subr.mxu0 %v899
          %940 = vmatpush1.msra.mxu0 %v898
          %941 = vmatprep.subr.mxu0 0.0
          %942 = vmatpush2.msra.mxu0 0.0
          %943 = vmatprep.subr.mxu0 0.0
          %944 = vmatpush2.msra.mxu0 0.0
          %945 = vmatprep.subr.mxu0 0.0
          %946 = vmatpush2.msra.mxu0 0.0
          %947 = vmatprep.subr.mxu0 0.0
          %948 = vmatpush2.msra.mxu0 0.0
          %949 = vmatprep.subr.mxu0 0.0
          %950 = vmatpush2.msra.mxu0 0.0
          %951 = vmatprep.subr.mxu0 0.0
          %952 = vmatpush2.msra.mxu0 0.0
          %953 = vmatprep.subr.mxu0 0.0
          %954 = vmatpush2.msra.mxu0 0.0
          %955 = vmatprep.subr.mxu0 0.0
          %956 = vmatpush2.msra.mxu0 0.0
          %957 = vmatprep.subr.mxu0 0.0
          %958 = vmatpush2.msra.mxu0 0.0
          %959 = vmatprep.subr.mxu0 0.0
          %960 = vmatpush2.msra.mxu0 0.0
          %961 = vmatprep.subr.mxu0 0.0
          %962 = vmatpush2.msra.mxu0 0.0
          %963 = vmatprep.subr.mxu0 0.0
          %964 = vmatpush2.msra.mxu0 0.0
          %965 = vmatprep.subr.mxu0 0.0
          %966 = vmatpush2.msra.mxu0 0.0
          %967 = vmatprep.subr.mxu0 0.0
          %968 = vmatpush2.msra.mxu0 0.0
          %969 = vmatprep.subr.mxu0 0.0
          %970 = vmatpush2.msra.mxu0 0.0
          %971 = vmatprep.subr.mxu0 0.0
          %972 = vmatpush2.msra.mxu0 0.0
          %973 = vmatprep.mubr.f32.mxu0 0.0
          %974 = vmatmul.mubr.f32.gmra.mxu0 %v907
          %v975 = vpop.f32.mrf.mxu0
          %v976 = vadd.f32 %v903, %v975
          %v977 = vpop.f32.mrf.mxu0
          %v978 = vadd.f32 %v903, %v977
          %979 = vdwg.mxu0
          %vm980 = vcmask 1040384
          %v981 = vsel %vm980, %v976, -inf
          %v982 = vsel %vm980, %v978, -inf
          %v983 = vmax.f32 %v981, %v982
          %984 = vmax.xlane.f32.xlu0 %v983
          %v985 = vpop.xlane.xlu0 %984
          %v986 = vsub.f32 %v976, %v985
          %v987 = vsub.f32 %v978, %v985
          %v988 = vmul.f32 %v986, 1.442695
          %v989 = vpow.pop %v988
          %v990 = vmul.f32 %v987, 1.442695
          %v991 = vpow.pop %v990
          %v992 = vsel %vm980, %v989, 0.0
          %v993 = vsel %vm980, %v991, 0.0
          %v994 = vadd.f32 %v992, %v993
          %995 = vadd.xlane.f32.xlu0 %v994
          %v996 = vpop.xlane.xlu0 %995
          %v997 = vrcp.pop %v996
          %v998 = vmul.f32 %v989, %v997
          %v999 = vmul.f32 %v991, %v997
          %v1002 = vcombine.low %v998, %v999
          %v1004 = vunpack.c.l.s4 1966171168
          %v1005 = vunpack.c.0.s8 %v1004
          %v1006 = vlaneseq
          %v1007 = vshrl.u32 %v1006, 7
          %v1008 = vsub.s32 %v1005, %v1007
          %v1009 = vrot.slane %v1002, %v1008
          %v1011 = vunpack.c.l.s4 1966171168
          %v1012 = vunpack.c.0.s8 %v1011
          %v1013 = vlaneseq
          %v1014 = vshrl.u32 %v1013, 7
          %v1015 = vsub.s32 %v1012, %v1014
          %v1016 = vrot.slane %v1009, %v1015
          %v1018 = vlaneseq
          %vm1019 = vcmp.ge.s32.totalorder %v1018, 0
          %vm1020 = vcmp.lt.s32.totalorder %v1018, 256
          %vm1021 = vmand %vm1019, %vm1020
          %1022 = vst.msk [vmem:[#allocation5] sm:$0x3] %vm1021, %v1016
        $region64: #{tpu_custom_call.1} parent=47 // pred_fallthru
          _
        // Predicated region
        $region65: #{tpu_custom_call.1} parent=47 // pred_check
          %p1023 = pneg %p537
        $region66: #{tpu_custom_call.1} parent=47 // pred_check_branch
          %1025 = sbr.rel (%p1023) target = $region68
        $region67: #{tpu_custom_call.1} parent=47 // pred_region
          %s1026 = sshra.s32 %s337, 7
          %s1027 = sand.u32 %s337, 127
          %s1028 = scalar_lea.vmem [#allocation5], %s1026
          %v1029 = vld [vmem:[%s1028] sm:$0x1]
          %v1030 = vld [vmem:[#allocation4] sm:$0x1]
          %1031 = vxpose.xlu0.b32.start [1/16] %v1029, 128
          %1032 = vxpose.xlu0.b32.cont [2/16] 0.0, 128
          %1033 = vxpose.xlu0.b32.cont [3/16] 0.0, 128
          %1034 = vxpose.xlu0.b32.cont [4/16] 0.0, 128
          %1035 = vxpose.xlu0.b32.cont [5/16] 0.0, 128
          %1036 = vxpose.xlu0.b32.cont [6/16] 0.0, 128
          %1037 = vxpose.xlu0.b32.cont [7/16] 0.0, 128
          %1038 = vxpose.xlu0.b32.cont [8/16] 0.0, 128
          %1039 = vxpose.xlu0.b32.cont [9/16] 0.0, 128
          %1040 = vxpose.xlu0.b32.cont [10/16] 0.0, 128
          %1041 = vxpose.xlu0.b32.cont [11/16] 0.0, 128
          %1042 = vxpose.xlu0.b32.cont [12/16] 0.0, 128
          %1043 = vxpose.xlu0.b32.cont [13/16] 0.0, 128
          %1044 = vxpose.xlu0.b32.cont [14/16] 0.0, 128
          %1045 = vxpose.xlu0.b32.cont [15/16] 0.0, 128
          %1046 = vxpose.xlu0.b32.end [16/16] 0.0, 128
          %v1047 = vpop.trf.xlu0
          %v1048 = vpop.trf.xlu0
          %v1049 = vpop.trf.xlu0
          %v1050 = vpop.trf.xlu0
          %v1051 = vpop.trf.xlu0
          %v1052 = vpop.trf.xlu0
          %v1053 = vpop.trf.xlu0
          %v1054 = vpop.trf.xlu0
          %v1055 = vpop.trf.xlu0
          %v1056 = vpop.trf.xlu0
          %v1057 = vpop.trf.xlu0
          %v1058 = vpop.trf.xlu0
          %v1059 = vpop.trf.xlu0
          %v1060 = vpop.trf.xlu0
          %v1061 = vpop.trf.xlu0
          %v1062 = vpop.trf.xlu0
          %vm1063 = vcmask 7168
          %v1065 = vsel %vm1063, %v1047, 0
          %v1068 = vsel %vm1063, %v1048, 0
          %v1071 = vsel %vm1063, %v1049, 0
          %v1074 = vsel %vm1063, %v1050, 0
          %v1077 = vsel %vm1063, %v1051, 0
          %v1080 = vsel %vm1063, %v1052, 0
          %v1083 = vsel %vm1063, %v1053, 0
          %v1086 = vsel %vm1063, %v1054, 0
          %v1089 = vsel %vm1063, %v1055, 0
          %v1092 = vsel %vm1063, %v1056, 0
          %v1095 = vsel %vm1063, %v1057, 0
          %v1098 = vsel %vm1063, %v1058, 0
          %v1101 = vsel %vm1063, %v1059, 0
          %v1104 = vsel %vm1063, %v1060, 0
          %v1107 = vsel %vm1063, %v1061, 0
          %v1110 = vsel %vm1063, %v1062, 0
          %vm1112 = vcmask 1040384
          %v1114 = vsel %vm1112, %v1030, 0
          %1116 = vmatprep.subr.mxu0 0.0
          %1117 = vmatpush1.msra.mxu0 0.0
          %1118 = vmatprep.subr.mxu0 0.0
          %1119 = vmatpush1.msra.mxu0 0.0
          %1120 = vmatprep.subr.mxu0 0.0
          %1121 = vmatpush1.msra.mxu0 0.0
          %1122 = vmatprep.subr.mxu0 0.0
          %1123 = vmatpush1.msra.mxu0 0.0
          %1124 = vmatprep.subr.mxu0 0.0
          %1125 = vmatpush1.msra.mxu0 0.0
          %1126 = vmatprep.subr.mxu0 0.0
          %1127 = vmatpush1.msra.mxu0 0.0
          %1128 = vmatprep.subr.mxu0 0.0
          %1129 = vmatpush1.msra.mxu0 0.0
          %1130 = vmatprep.subr.mxu0 0.0
          %1131 = vmatpush1.msra.mxu0 0.0
          %1132 = vmatprep.subr.mxu0 0.0
          %1133 = vmatpush1.msra.mxu0 0.0
          %1134 = vmatprep.subr.mxu0 0.0
          %1135 = vmatpush1.msra.mxu0 0.0
          %1136 = vmatprep.subr.mxu0 0.0
          %1137 = vmatpush1.msra.mxu0 0.0
          %1138 = vmatprep.subr.mxu0 0.0
          %1139 = vmatpush1.msra.mxu0 0.0
          %1140 = vmatprep.subr.mxu0 0.0
          %1141 = vmatpush1.msra.mxu0 0.0
          %1142 = vmatprep.subr.mxu0 0.0
          %1143 = vmatpush1.msra.mxu0 0.0
          %1144 = vmatprep.subr.mxu0 0.0
          %1145 = vmatpush1.msra.mxu0 0.0
          %1146 = vmatprep.subr.mxu0 0.0
          %1147 = vmatpush1.msra.mxu0 %v1114
          %1148 = vmatprep.subr.mxu0 0.0
          %1149 = vmatpush2.msra.mxu0 0.0
          %1150 = vmatprep.subr.mxu0 0.0
          %1151 = vmatpush2.msra.mxu0 0.0
          %1152 = vmatprep.subr.mxu0 0.0
          %1153 = vmatpush2.msra.mxu0 0.0
          %1154 = vmatprep.subr.mxu0 0.0
          %1155 = vmatpush2.msra.mxu0 0.0
          %1156 = vmatprep.subr.mxu0 0.0
          %1157 = vmatpush2.msra.mxu0 0.0
          %1158 = vmatprep.subr.mxu0 0.0
          %1159 = vmatpush2.msra.mxu0 0.0
          %1160 = vmatprep.subr.mxu0 0.0
          %1161 = vmatpush2.msra.mxu0 0.0
          %1162 = vmatprep.subr.mxu0 0.0
          %1163 = vmatpush2.msra.mxu0 0.0
          %1164 = vmatprep.subr.mxu0 0.0
          %1165 = vmatpush2.msra.mxu0 0.0
          %1166 = vmatprep.subr.mxu0 0.0
          %1167 = vmatpush2.msra.mxu0 0.0
          %1168 = vmatprep.subr.mxu0 0.0
          %1169 = vmatpush2.msra.mxu0 0.0
          %1170 = vmatprep.subr.mxu0 0.0
          %1171 = vmatpush2.msra.mxu0 0.0
          %1172 = vmatprep.subr.mxu0 0.0
          %1173 = vmatpush2.msra.mxu0 0.0
          %1174 = vmatprep.subr.mxu0 0.0
          %1175 = vmatpush2.msra.mxu0 0.0
          %1176 = vmatprep.subr.mxu0 0.0
          %1177 = vmatpush2.msra.mxu0 0.0
          %1178 = vmatprep.subr.mxu0 0.0
          %1179 = vmatpush2.msra.mxu0 0.0
          %1180 = vmatprep.mubr.f32.mxu0 0.0
          %1181 = vmatmul.mubr.f32.gmra.mxu0 %v1065
          %v1182 = vpop.f32.mrf.mxu0
          %v1183 = vadd.f32 0.0, %v1182
          %v1184 = vpop.f32.mrf.mxu0
          %1185 = vmatprep.mubr.f32.mxu0 0.0
          %1186 = vmatmul.mubr.f32.gmra.mxu0 %v1068
          %v1187 = vpop.f32.mrf.mxu0
          %v1188 = vadd.f32 0.0, %v1187
          %v1189 = vpop.f32.mrf.mxu0
          %1190 = vmatprep.mubr.f32.mxu0 0.0
          %1191 = vmatmul.mubr.f32.gmra.mxu0 %v1071
          %v1192 = vpop.f32.mrf.mxu0
          %v1193 = vadd.f32 0.0, %v1192
          %v1194 = vpop.f32.mrf.mxu0
          %1195 = vmatprep.mubr.f32.mxu0 0.0
          %1196 = vmatmul.mubr.f32.gmra.mxu0 %v1074
          %v1197 = vpop.f32.mrf.mxu0
          %v1198 = vadd.f32 0.0, %v1197
          %v1199 = vpop.f32.mrf.mxu0
          %1200 = vmatprep.mubr.f32.mxu0 0.0
          %1201 = vmatmul.mubr.f32.gmra.mxu0 %v1077
          %v1202 = vpop.f32.mrf.mxu0
          %v1203 = vadd.f32 0.0, %v1202
          %v1204 = vpop.f32.mrf.mxu0
          %1205 = vmatprep.mubr.f32.mxu0 0.0
          %1206 = vmatmul.mubr.f32.gmra.mxu0 %v1080
          %v1207 = vpop.f32.mrf.mxu0
          %v1208 = vadd.f32 0.0, %v1207
          %v1209 = vpop.f32.mrf.mxu0
          %1210 = vmatprep.mubr.f32.mxu0 0.0
          %1211 = vmatmul.mubr.f32.gmra.mxu0 %v1083
          %v1212 = vpop.f32.mrf.mxu0
          %v1213 = vadd.f32 0.0, %v1212
          %v1214 = vpop.f32.mrf.mxu0
          %1215 = vmatprep.mubr.f32.mxu0 0.0
          %1216 = vmatmul.mubr.f32.gmra.mxu0 %v1086
          %v1217 = vpop.f32.mrf.mxu0
          %v1218 = vadd.f32 0.0, %v1217
          %v1219 = vpop.f32.mrf.mxu0
          %1220 = vmatprep.mubr.f32.mxu0 0.0
          %1221 = vmatmul.mubr.f32.gmra.mxu0 %v1089
          %v1222 = vpop.f32.mrf.mxu0
          %v1223 = vadd.f32 0.0, %v1222
          %v1224 = vpop.f32.mrf.mxu0
          %1225 = vmatprep.mubr.f32.mxu0 0.0
          %1226 = vmatmul.mubr.f32.gmra.mxu0 %v1092
          %v1227 = vpop.f32.mrf.mxu0
          %v1228 = vadd.f32 0.0, %v1227
          %v1229 = vpop.f32.mrf.mxu0
          %1230 = vmatprep.mubr.f32.mxu0 0.0
          %1231 = vmatmul.mubr.f32.gmra.mxu0 %v1095
          %v1232 = vpop.f32.mrf.mxu0
          %v1233 = vadd.f32 0.0, %v1232
          %v1234 = vpop.f32.mrf.mxu0
          %1235 = vmatprep.mubr.f32.mxu0 0.0
          %1236 = vmatmul.mubr.f32.gmra.mxu0 %v1098
          %v1237 = vpop.f32.mrf.mxu0
          %v1238 = vadd.f32 0.0, %v1237
          %v1239 = vpop.f32.mrf.mxu0
          %1240 = vmatprep.mubr.f32.mxu0 0.0
          %1241 = vmatmul.mubr.f32.gmra.mxu0 %v1101
          %v1242 = vpop.f32.mrf.mxu0
          %v1243 = vadd.f32 0.0, %v1242
          %v1244 = vpop.f32.mrf.mxu0
          %1245 = vmatprep.mubr.f32.mxu0 0.0
          %1246 = vmatmul.mubr.f32.gmra.mxu0 %v1104
          %v1247 = vpop.f32.mrf.mxu0
          %v1248 = vadd.f32 0.0, %v1247
          %v1249 = vpop.f32.mrf.mxu0
          %1250 = vmatprep.mubr.f32.mxu0 0.0
          %1251 = vmatmul.mubr.f32.gmra.mxu0 %v1107
          %v1252 = vpop.f32.mrf.mxu0
          %v1253 = vadd.f32 0.0, %v1252
          %v1254 = vpop.f32.mrf.mxu0
          %1255 = vmatprep.mubr.f32.mxu0 0.0
          %1256 = vmatmul.mubr.f32.gmra.mxu0 %v1110
          %v1257 = vpop.f32.mrf.mxu0
          %v1258 = vadd.f32 0.0, %v1257
          %v1259 = vpop.f32.mrf.mxu0
          %1260 = vdwg.mxu0
          %1261 = vst [vmem:[%s331] sm:$0xff] %v1183
          %1262 = vst [vmem:[%s331 + $0x8] sm:$0xff] %v1188
          %1263 = vst [vmem:[%s331 + $0x10] sm:$0xff] %v1193
          %1264 = vst [vmem:[%s331 + $0x18] sm:$0xff] %v1198
          %1265 = vst [vmem:[%s331 + $0x20] sm:$0xff] %v1203
          %1266 = vst [vmem:[%s331 + $0x28] sm:$0xff] %v1208
          %1267 = vst [vmem:[%s331 + $0x30] sm:$0xff] %v1213
          %1268 = vst [vmem:[%s331 + $0x38] sm:$0xff] %v1218
          %1269 = vst [vmem:[%s331 + $0x40] sm:$0xff] %v1223
          %1270 = vst [vmem:[%s331 + $0x48] sm:$0xff] %v1228
          %1271 = vst [vmem:[%s331 + $0x50] sm:$0xff] %v1233
          %1272 = vst [vmem:[%s331 + $0x58] sm:$0xff] %v1238
          %1273 = vst [vmem:[%s331 + $0x60] sm:$0xff] %v1243
          %1274 = vst [vmem:[%s331 + $0x68] sm:$0xff] %v1248
          %1275 = vst [vmem:[%s331 + $0x70] sm:$0xff] %v1253
          %1276 = vst [vmem:[%s331 + $0x78] sm:$0xff] %v1258
        $region68: #{tpu_custom_call.1} parent=47 // pred_fallthru
          _
        %s1277 = sand.u32 %s215, 1
        %s1278 = scalar_lea.sflag [#allocation8], %s1277
        %s1279 = sand.u32 %s215, 1
        %s1280 = smul.addr %s1279, 128
        %s1281 = scalar_lea.vmem [#allocation9], %s1280
        // Predicated region
        $region69: #{tpu_custom_call.1} parent=47 // pred_check
          %p1282 = pneg %p225
        $region70: #{tpu_custom_call.1} parent=47 // pred_check_branch
          %1284 = sbr.rel (%p1282) target = $region72
        $region71: #{tpu_custom_call.1} parent=47 // pred_region
          %s1285 = smul.u32 %s31, %s30
          %s1286 = smul.u32 16, %s1285
          %s1288 = ssub.s32 2048, 2048
          %1289 = vsyncadd %s1278, %s1288
          %s1290 = smul.addr %s29, 32
          %s1291 = sadd.s32 %s1286, %s1290
          %s1292 = smul.addr %s1291, 128
          %s1293 = scalar_lea.hbm %s7, %s1292
          %s1294 = sshll.u32 %s1281, 4
          %s1295 = int_to_ptr.vmem [resolvable:$true] %s1294
          %1300 = dma.vmem_to_hbm [thread:$0]  %s1295, 2048, %s1293, %s1278, 128, 128, 8
        $region72: #{tpu_custom_call.1} parent=47 // pred_fallthru
          _
      $region48: #{tpu_custom_call.1} parent=5 // pred_fallthru
        _
      %p1301 = scmp.le.s32.totalorder 2, %s19
      // Predicated region
      $region73: #{tpu_custom_call.1} parent=5 // pred_check
        %p1302 = pneg %p1301
      $region74: #{tpu_custom_call.1} parent=5 // pred_check_branch
        %1304 = sbr.rel (%p1302) target = $region76
      $region75: #{tpu_custom_call.1} parent=5 // pred_region
        %s1305 = ssub.s32 %s19, 2
        // Predicated region
        $region77: #{tpu_custom_call.1} parent=75 // pred_check
          %p1306 = pneg %p231
        $region78: #{tpu_custom_call.1} parent=75 // pred_check_branch
          %1308 = sbr.rel (%p1306) target = $region80
        $region79: #{tpu_custom_call.1} parent=75 // pred_region
          %s1309 = sand.u32 %s216, 1
          %s1310 = scalar_lea.sflag [#allocation8], %s1309
          %s1311 = sand.u32 %s216, 1
          %s1312 = smul.addr %s1311, 128
          %s1313 = scalar_lea.vmem [#allocation9], %s1312
          %1314 = dma.done %s1310, 2048
        $region80: #{tpu_custom_call.1} parent=75 // pred_fallthru
          _
      $region76: #{tpu_custom_call.1} parent=5 // pred_fallthru
        _
    $region6: #{tpu_custom_call.1} parent=1 // loop_footer
      %s23 = sadd.s32 1, %s19
    $region7: #{tpu_custom_call.1} parent=1 // loop_footer_branch
      %18 = sbr.rel target = $region3
    $region8: #{tpu_custom_call.1} parent=1 // loop_exit
      _
    %1315 = vsyncpa [#allocation7], 1
    %s1316 = scalar_lea.sflag [#allocation7], 1
    %1317 = vsyncpa %s1316, 1
    %1318 = vsyncpa [#allocation8], 1
    %s1319 = scalar_lea.sflag [#allocation8], 1
    %1320 = vsyncpa %s1319, 1

</llo_original>
